<compile_context>
chip_gen: v7x
topology: tpu7x:2x2x1
jax: 0.10.0
libtpu: 0.0.40
codegen_flags: <defaults>
</compile_context>

<pallas_src>
import jax
import jax.numpy as jnp
from jax.experimental import pallas as pl
from jax.experimental.pallas import tpu as pltpu

EMBED_DIM = 4    # Attention(4, num_heads=4)
NUM_HEADS = 4    # head_dim = 1 -> per-head QK^T is elementwise, scale = 1/sqrt(1) = 1
LN_EPS = 1e-5

# ---- packed scalar-parameter layout (single SMEM f32 vector) -----------------
_E = EMBED_DIM
_WQ, _BQ, _WK, _BK, _WV, _BV = 0, 4, 8, 12, 16, 20
_INW_Q, _INW_K, _INW_V = 24, 40, 56          # MHA in-proj (E, E) row-major each
_INB_Q, _INB_K, _INB_V = 72, 76, 80
_OUTW, _OUTB = 84, 100                        # out_proj (E, E) row-major, bias (E,)
_LNG, _LNB = 104, 108
_HEADW, _HEADB = 112, 116
_PARAMS_USED = 117
PARAMS_LEN = 128


def _fold_in_proj(p, w_off, b_off, inw_off, inb_off):
    """Fold Linear(1, E) (x*w + b) followed by the MHA in-projection (E x E)
    into per-output-plane scalar affine coeffs:  plane_e = x * a[e] + c[e].
    Pure scalar-unit math on SMEM-resident params (effectively free)."""
    a, c = [], []
    for e in range(_E):
        s_a = p[inw_off + e * _E] * p[w_off]
        s_c = p[inw_off + e * _E] * p[b_off]
        for f in range(1, _E):
            w_ef = p[inw_off + e * _E + f]
            s_a = s_a + w_ef * p[w_off + f]
            s_c = s_c + w_ef * p[b_off + f]
        a.append(s_a)
        c.append(s_c + p[inb_off + e])
    return a, c


def style_encoder_kernel(oh_q_ref, sel_ref, tbl_ref, prm_ref, out_ref):
    S = oh_q_ref.shape[1]
    p = prm_ref  # SMEM scalars

    # --- embeddings: two small MXU dots (K = S ~ 8, negligible) ---------------
    # obj_embedding = Linear(S, D, bias=False)(one_hot)        (query rows only)
    obj_q = jnp.dot(oh_q_ref[...], tbl_ref[0:S, :],
                    preferred_element_type=jnp.float32)            # (TQ, D) f32
    # my_obj_embedding = Embedding(S, D)(argmax(one_hot, 1))    (all key rows)
    my_all = jnp.dot(sel_ref[...], tbl_ref[S:2 * S, :],
                     preferred_element_type=jnp.float32)           # (B, D) f32

    # --- Wq/Wk/Wv + MHA in-projection folded into scalar affines --------------
    aq, cq = _fold_in_proj(p, _WQ, _BQ, _INW_Q, _INB_Q)
    ak, ck = _fold_in_proj(p, _WK, _BK, _INW_K, _INB_K)
    av, cv = _fold_in_proj(p, _WV, _BV, _INW_V, _INB_V)

    # SoA: E=4 separate full-width planes instead of a (..., E=4) lane axis.
    q_pl = [obj_q * aq[e] + cq[e] for e in range(_E)]              # (TQ, D) each
    k_pl = [my_all * ak[e] + ck[e] for e in range(_E)]             # (B,  D) each
    v_pl = [my_all * av[e] + cv[e] for e in range(_E)]             # (B,  D) each

    # --- multi-head attention over the batch (sequence) axis ------------------
    # head_dim = 1, scale = 1: scores_e[l, j, n] = q_e[l, n] * k_e[j, n];
    # softmax over keys j; normalization deferred to after the V-sum so only a
    # (TQ, D) tensor gets scaled (EUP approximate reciprocal).
    # The exact per-row max over keys is q*kmax / q*kmin (sign of q), so the
    # rank-3 tensor never needs a max-reduce pass.
    # TODO(synk): MHA attn-dropout(0.1) & module Dropout(0.1) are eval-mode identities.
    ctx = []
    for e in range(_E):
        q_e, k_e, v_e = q_pl[e], k_pl[e], v_pl[e]
        kmax = jnp.max(k_e, axis=0, keepdims=True)                 # (1, D)
        kmin = jnp.min(k_e, axis=0, keepdims=True)                 # (1, D)
        m = jnp.where(q_e >= 0.0, q_e * kmax, q_e * kmin)          # (TQ, D) exact max_j
        w = jnp.exp(q_e[:, None, :] * k_e[None, :, :] - m[:, None, :])   # (TQ, B, D)
        num = jnp.sum(w * v_e[None, :, :], axis=1)                 # (TQ, D)
        den = jnp.sum(w, axis=1)                                   # (TQ, D)
        ctx.append(num * pl.reciprocal(den, approx=True))

    # --- MHA out-projection (E x E, unrolled scalar FMAs over planes) ---------
    o_pl = []
    for e in range(_E):
        acc = ctx[0] * p[_OUTW + e * _E]
        for f in range(1, _E):
            acc = acc + ctx[f] * p[_OUTW + e * _E + f]
        o_pl.append(acc + p[_OUTB + e])

    # --- LayerNorm over the E=4 planes (unrolled stats, no cross-lane reduce) -
    mu = (o_pl[0] + o_pl[1] + o_pl[2] + o_pl[3]) * (1.0 / _E)
    d = [o_pl[e] - mu for e in range(_E)]
    var = (d[0] * d[0] + d[1] * d[1] + d[2] * d[2] + d[3] * d[3]) * (1.0 / _E)
    inv = jax.lax.rsqrt(var + LN_EPS)

    # --- head: Linear(E, 1), then ResidualConnect: relu(obj + attn) -----------
    attn = None
    for e in range(_E):
        y_e = d[e] * inv * p[_LNG + e] + p[_LNB + e]
        t = y_e * p[_HEADW + e]
        attn = t if attn is None else attn + t
    attn = attn + p[_HEADB]

    out_ref[...] = jnp.maximum(obj_q + attn, 0.0)


# ------------------------------ host-side helpers ------------------------------

def init_params(key, S, D, E=EMBED_DIM):
    ks = jax.random.split(key, 14)

    def n(k, shape, scale=0.1):
        return (scale * jax.random.normal(k, shape)).astype(jnp.float32)

    return dict(
        w_obj=n(ks[0], (D, S)),               # obj_vector: Linear(S, D, bias=False).weight
        emb=n(ks[1], (S, D)),                 # my_obj_vector: Embedding(S, D).weight
        wq=n(ks[2], (E, 1)), bq=n(ks[3], (E,)),
        wk=n(ks[4], (E, 1)), bk=n(ks[5], (E,)),
        wv=n(ks[6], (E, 1)), bv=n(ks[7], (E,)),
        in_proj_w=n(ks[8], (3 * E, E)), in_proj_b=n(ks[9], (3 * E,)),
        out_w=n(ks[10], (E, E)), out_b=n(ks[11], (E,)),
        ln_g=jnp.ones((E,), jnp.float32), ln_b=jnp.zeros((E,), jnp.float32),
        head_w=n(ks[12], (1, E)), head_b=n(ks[13], (1,)),
    )


def pack_scalar_params(params):
    E = EMBED_DIM
    inw = params["in_proj_w"].astype(jnp.float32)
    inb = params["in_proj_b"].astype(jnp.float32)
    pieces = [
        params["wq"].reshape(-1), params["bq"].reshape(-1),
        params["wk"].reshape(-1), params["bk"].reshape(-1),
        params["wv"].reshape(-1), params["bv"].reshape(-1),
        inw[0:E].reshape(-1), inw[E:2 * E].reshape(-1), inw[2 * E:3 * E].reshape(-1),
        inb[0:E], inb[E:2 * E], inb[2 * E:3 * E],
        params["out_w"].reshape(-1), params["out_b"].reshape(-1),
        params["ln_g"].reshape(-1), params["ln_b"].reshape(-1),
        params["head_w"].reshape(-1), params["head_b"].reshape(-1),
    ]
    flat = jnp.concatenate([x.astype(jnp.float32) for x in pieces])
    assert flat.shape[0] == _PARAMS_USED
    return jnp.pad(flat, (0, PARAMS_LEN - _PARAMS_USED))


def _pick_tq(B, D, budget_bytes=20 * 1024 * 1024):
    """Query-axis tile so the per-head (tq, B, D) f32 softmax working set
    (~2 live copies) stays within a conservative VMEM budget."""
    per_row = 2 * max(B, 1) * max(D, 1) * 4
    tq = int(max(8, min(128, budget_bytes // per_row)))
    tq = (tq // 8) * 8
    return B if B <= tq else tq


def style_encoder_forward(one_hot, params, *, tq=None):
    one_hot = one_hot.astype(jnp.float32)
    B, S = one_hot.shape
    D = params["w_obj"].shape[0]

    # argmax(one_hot) computed XLA-side; Embedding lookup becomes one MXU dot.
    sel = jax.nn.one_hot(jnp.argmax(one_hot, axis=1), S, dtype=jnp.float32)

    # One VMEM slab for both (S, D) tables + one SMEM vector for small params.
    tables = jnp.concatenate(
        [params["w_obj"].T.astype(jnp.float32), params["emb"].astype(jnp.float32)],
        axis=0)                                                     # (2S, D) f32
    prm = pack_scalar_params(params)                                # (128,) SMEM

    if tq is None:
        tq = _pick_tq(B, D)
    grid = (pl.cdiv(B, tq),)

    return pl.pallas_call(
        style_encoder_kernel,
        out_shape=jax.ShapeDtypeStruct((B, D), jnp.float32),
        grid_spec=pltpu.PrefetchScalarGridSpec(
            num_scalar_prefetch=0,
            grid=grid,
            in_specs=[
                pl.BlockSpec((tq, S), lambda i: (i, 0)),            # query tile of one_hot
                pl.BlockSpec((B, S), lambda i: (0, 0)),             # key-side argmax selector
                pl.BlockSpec((2 * S, D), lambda i: (0, 0)),         # packed weight tables
                pl.BlockSpec(memory_space=pltpu.MemorySpace.SMEM),  # packed scalar params
            ],
            out_specs=pl.BlockSpec((tq, D), lambda i: (i, 0)),
        ),
        compiler_params=pltpu.CompilerParams(
            dimension_semantics=("parallel",),   # query tiles shard across TCs
            vmem_limit_bytes=64 * 1024 * 1024,
        ),
    )(one_hot, sel, tables, prm)


def style_encoder_ref(one_hot, params):
    """Pure-JAX f32 reference mirroring the PyTorch module (eval mode)."""
    E = EMBED_DIM
    one_hot = one_hot.astype(jnp.float32)
    obj = one_hot @ params["w_obj"].T                                # (B, D)
    my = params["emb"][jnp.argmax(one_hot, axis=1)]                  # (B, D)
    Q = obj[..., None] * params["wq"][:, 0] + params["bq"]           # (B, D, E)
    K = my[..., None] * params["wk"][:, 0] + params["bk"]
    V = my[..., None] * params["wv"][:, 0] + params["bv"]
    inw, inb = params["in_proj_w"], params["in_proj_b"]
    q = Q @ inw[0:E].T + inb[0:E]
    k = K @ inw[E:2 * E].T + inb[E:2 * E]
    v = V @ inw[2 * E:3 * E].T + inb[2 * E:3 * E]
    s = jnp.einsum("lne,jne->ljne", q, k)                            # head_dim=1, scale=1
    p = jax.nn.softmax(s, axis=1)
    ctx = jnp.einsum("ljne,jne->lne", p, v)
    o = ctx @ params["out_w"].T + params["out_b"]
    mu = o.mean(-1, keepdims=True)
    var = ((o - mu) ** 2).mean(-1, keepdims=True)
    y = (o - mu) / jnp.sqrt(var + LN_EPS) * params["ln_g"] + params["ln_b"]
    attn = (y @ params["head_w"].T)[..., 0] + params["head_b"][0]    # (B, D)
    return jnp.maximum(obj + attn, 0.0)


if __name__ == "__main__":
    key = jax.random.PRNGKey(0)
    B, S, D = 2, 8, 32          # batch, len(train_subjects.split()), feature_dim
    pkey, ikey = jax.random.split(key)
    params = init_params(pkey, S, D)
    idx = jax.random.randint(ikey, (B,), 0, S)
    one_hot = jax.nn.one_hot(idx, S, dtype=jnp.float32)

    out = jax.block_until_ready(style_encoder_forward(one_hot, params))
    ref = jax.block_until_ready(style_encoder_ref(one_hot, params))

    assert out.shape == (B, D)
    assert bool(jnp.all(jnp.isfinite(out)))
    err = float(jnp.max(jnp.abs(out - ref)))
    assert err < 1e-2, f"max abs err vs reference = {err}"
    print("KERNEL_OK")
</pallas_src>

<mosaic_0001>
module attributes {stable_mosaic.version = 11 : i64} {
  func.func @style_encoder_kernel(%arg0: i32, %arg1: memref<2x8xf32, #tpu.memory_space<vmem>>, %arg2: memref<2x8xf32, #tpu.memory_space<vmem>>, %arg3: memref<16x32xf32, #tpu.memory_space<vmem>>, %arg4: memref<128xf32, #tpu.memory_space<smem>>, %arg5: memref<2x32xf32, #tpu.memory_space<vmem>>) attributes {dimension_semantics = [#tpu.dimension_semantics<parallel>], iteration_bounds = array<i64: 1>, scalar_prefetch = 0 : i64, scratch_operands = 0 : i64, tpu.core_type = #tpu.core_type<tc>, window_params = [{transform_indices = @transform_0, window_bounds = array<i64: 2, 8>}, {pipeline_mode = #tpu.pipeline_mode<synchronous>, transform_indices = @transform_1, window_bounds = array<i64: 2, 8>}, {pipeline_mode = #tpu.pipeline_mode<synchronous>, transform_indices = @transform_2, window_bounds = array<i64: 16, 32>}, {transform_indices = @transform_3, window_bounds = array<i64: 128>}, {transform_indices = @transform_4, window_bounds = array<i64: 2, 32>}]} {
    %c0 = arith.constant 0 : index
    %c0_0 = arith.constant 0 : index
    %0 = vector.load %arg1[%c0, %c0_0] : memref<2x8xf32, #tpu.memory_space<vmem>>, vector<2x8xf32>
    %c0_1 = arith.constant 0 : index
    %c0_2 = arith.constant 0 : index
    %1 = vector.load %arg3[%c0_1, %c0_2] : memref<16x32xf32, #tpu.memory_space<vmem>>, vector<8x32xf32>
    %cst = arith.constant dense<0.000000e+00> : vector<2x32xf32>
    %2 = tpu.matmul %0, %1, %cst {dimension_numbers = #tpu.dot_dimension_numbers<[1], [0], [0], [1], [0, 0, 1, 1], [], []>} : vector<2x8xf32>, vector<8x32xf32>, vector<2x32xf32> -> vector<2x32xf32>
    %c0_3 = arith.constant 0 : index
    %c0_4 = arith.constant 0 : index
    %3 = vector.load %arg2[%c0_3, %c0_4] : memref<2x8xf32, #tpu.memory_space<vmem>>, vector<2x8xf32>
    %c8 = arith.constant 8 : index
    %c0_5 = arith.constant 0 : index
    %4 = vector.load %arg3[%c8, %c0_5] : memref<16x32xf32, #tpu.memory_space<vmem>>, vector<8x32xf32>
    %cst_6 = arith.constant dense<0.000000e+00> : vector<2x32xf32>
    %5 = tpu.matmul %3, %4, %cst_6 {dimension_numbers = #tpu.dot_dimension_numbers<[1], [0], [0], [1], [0, 0, 1, 1], [], []>} : vector<2x8xf32>, vector<8x32xf32>, vector<2x32xf32> -> vector<2x32xf32>
    %c24 = arith.constant 24 : index
    %6 = memref.load %arg4[%c24] : memref<128xf32, #tpu.memory_space<smem>>
    %c0_7 = arith.constant 0 : index
    %7 = memref.load %arg4[%c0_7] : memref<128xf32, #tpu.memory_space<smem>>
    %8 = arith.mulf %6, %7 : f32
    %c24_8 = arith.constant 24 : index
    %9 = memref.load %arg4[%c24_8] : memref<128xf32, #tpu.memory_space<smem>>
    %c4 = arith.constant 4 : index
    %10 = memref.load %arg4[%c4] : memref<128xf32, #tpu.memory_space<smem>>
    %11 = arith.mulf %9, %10 : f32
    %c25 = arith.constant 25 : index
    %12 = memref.load %arg4[%c25] : memref<128xf32, #tpu.memory_space<smem>>
    %c1 = arith.constant 1 : index
    %13 = memref.load %arg4[%c1] : memref<128xf32, #tpu.memory_space<smem>>
    %14 = arith.mulf %12, %13 : f32
    %15 = arith.addf %8, %14 : f32
    %c5 = arith.constant 5 : index
    %16 = memref.load %arg4[%c5] : memref<128xf32, #tpu.memory_space<smem>>
    %17 = arith.mulf %12, %16 : f32
    %18 = arith.addf %11, %17 : f32
    %c26 = arith.constant 26 : index
    %19 = memref.load %arg4[%c26] : memref<128xf32, #tpu.memory_space<smem>>
    %c2 = arith.constant 2 : index
    %20 = memref.load %arg4[%c2] : memref<128xf32, #tpu.memory_space<smem>>
    %21 = arith.mulf %19, %20 : f32
    %22 = arith.addf %15, %21 : f32
    %c6 = arith.constant 6 : index
    %23 = memref.load %arg4[%c6] : memref<128xf32, #tpu.memory_space<smem>>
    %24 = arith.mulf %19, %23 : f32
    %25 = arith.addf %18, %24 : f32
    %c27 = arith.constant 27 : index
    %26 = memref.load %arg4[%c27] : memref<128xf32, #tpu.memory_space<smem>>
    %c3 = arith.constant 3 : index
    %27 = memref.load %arg4[%c3] : memref<128xf32, #tpu.memory_space<smem>>
    %28 = arith.mulf %26, %27 : f32
    %29 = arith.addf %22, %28 : f32
    %c7 = arith.constant 7 : index
    %30 = memref.load %arg4[%c7] : memref<128xf32, #tpu.memory_space<smem>>
    %31 = arith.mulf %26, %30 : f32
    %32 = arith.addf %25, %31 : f32
    %c72 = arith.constant 72 : index
    %33 = memref.load %arg4[%c72] : memref<128xf32, #tpu.memory_space<smem>>
    %34 = arith.addf %32, %33 : f32
    %c28 = arith.constant 28 : index
    %35 = memref.load %arg4[%c28] : memref<128xf32, #tpu.memory_space<smem>>
    %c0_9 = arith.constant 0 : index
    %36 = memref.load %arg4[%c0_9] : memref<128xf32, #tpu.memory_space<smem>>
    %37 = arith.mulf %35, %36 : f32
    %c28_10 = arith.constant 28 : index
    %38 = memref.load %arg4[%c28_10] : memref<128xf32, #tpu.memory_space<smem>>
    %c4_11 = arith.constant 4 : index
    %39 = memref.load %arg4[%c4_11] : memref<128xf32, #tpu.memory_space<smem>>
    %40 = arith.mulf %38, %39 : f32
    %c29 = arith.constant 29 : index
    %41 = memref.load %arg4[%c29] : memref<128xf32, #tpu.memory_space<smem>>
    %c1_12 = arith.constant 1 : index
    %42 = memref.load %arg4[%c1_12] : memref<128xf32, #tpu.memory_space<smem>>
    %43 = arith.mulf %41, %42 : f32
    %44 = arith.addf %37, %43 : f32
    %c5_13 = arith.constant 5 : index
    %45 = memref.load %arg4[%c5_13] : memref<128xf32, #tpu.memory_space<smem>>
    %46 = arith.mulf %41, %45 : f32
    %47 = arith.addf %40, %46 : f32
    %c30 = arith.constant 30 : index
    %48 = memref.load %arg4[%c30] : memref<128xf32, #tpu.memory_space<smem>>
    %c2_14 = arith.constant 2 : index
    %49 = memref.load %arg4[%c2_14] : memref<128xf32, #tpu.memory_space<smem>>
    %50 = arith.mulf %48, %49 : f32
    %51 = arith.addf %44, %50 : f32
    %c6_15 = arith.constant 6 : index
    %52 = memref.load %arg4[%c6_15] : memref<128xf32, #tpu.memory_space<smem>>
    %53 = arith.mulf %48, %52 : f32
    %54 = arith.addf %47, %53 : f32
    %c31 = arith.constant 31 : index
    %55 = memref.load %arg4[%c31] : memref<128xf32, #tpu.memory_space<smem>>
    %c3_16 = arith.constant 3 : index
    %56 = memref.load %arg4[%c3_16] : memref<128xf32, #tpu.memory_space<smem>>
    %57 = arith.mulf %55, %56 : f32
    %58 = arith.addf %51, %57 : f32
    %c7_17 = arith.constant 7 : index
    %59 = memref.load %arg4[%c7_17] : memref<128xf32, #tpu.memory_space<smem>>
    %60 = arith.mulf %55, %59 : f32
    %61 = arith.addf %54, %60 : f32
    %c73 = arith.constant 73 : index
    %62 = memref.load %arg4[%c73] : memref<128xf32, #tpu.memory_space<smem>>
    %63 = arith.addf %61, %62 : f32
    %c32 = arith.constant 32 : index
    %64 = memref.load %arg4[%c32] : memref<128xf32, #tpu.memory_space<smem>>
    %c0_18 = arith.constant 0 : index
    %65 = memref.load %arg4[%c0_18] : memref<128xf32, #tpu.memory_space<smem>>
    %66 = arith.mulf %64, %65 : f32
    %c32_19 = arith.constant 32 : index
    %67 = memref.load %arg4[%c32_19] : memref<128xf32, #tpu.memory_space<smem>>
    %c4_20 = arith.constant 4 : index
    %68 = memref.load %arg4[%c4_20] : memref<128xf32, #tpu.memory_space<smem>>
    %69 = arith.mulf %67, %68 : f32
    %c33 = arith.constant 33 : index
    %70 = memref.load %arg4[%c33] : memref<128xf32, #tpu.memory_space<smem>>
    %c1_21 = arith.constant 1 : index
    %71 = memref.load %arg4[%c1_21] : memref<128xf32, #tpu.memory_space<smem>>
    %72 = arith.mulf %70, %71 : f32
    %73 = arith.addf %66, %72 : f32
    %c5_22 = arith.constant 5 : index
    %74 = memref.load %arg4[%c5_22] : memref<128xf32, #tpu.memory_space<smem>>
    %75 = arith.mulf %70, %74 : f32
    %76 = arith.addf %69, %75 : f32
    %c34 = arith.constant 34 : index
    %77 = memref.load %arg4[%c34] : memref<128xf32, #tpu.memory_space<smem>>
    %c2_23 = arith.constant 2 : index
    %78 = memref.load %arg4[%c2_23] : memref<128xf32, #tpu.memory_space<smem>>
    %79 = arith.mulf %77, %78 : f32
    %80 = arith.addf %73, %79 : f32
    %c6_24 = arith.constant 6 : index
    %81 = memref.load %arg4[%c6_24] : memref<128xf32, #tpu.memory_space<smem>>
    %82 = arith.mulf %77, %81 : f32
    %83 = arith.addf %76, %82 : f32
    %c35 = arith.constant 35 : index
    %84 = memref.load %arg4[%c35] : memref<128xf32, #tpu.memory_space<smem>>
    %c3_25 = arith.constant 3 : index
    %85 = memref.load %arg4[%c3_25] : memref<128xf32, #tpu.memory_space<smem>>
    %86 = arith.mulf %84, %85 : f32
    %87 = arith.addf %80, %86 : f32
    %c7_26 = arith.constant 7 : index
    %88 = memref.load %arg4[%c7_26] : memref<128xf32, #tpu.memory_space<smem>>
    %89 = arith.mulf %84, %88 : f32
    %90 = arith.addf %83, %89 : f32
    %c74 = arith.constant 74 : index
    %91 = memref.load %arg4[%c74] : memref<128xf32, #tpu.memory_space<smem>>
    %92 = arith.addf %90, %91 : f32
    %c36 = arith.constant 36 : index
    %93 = memref.load %arg4[%c36] : memref<128xf32, #tpu.memory_space<smem>>
    %c0_27 = arith.constant 0 : index
    %94 = memref.load %arg4[%c0_27] : memref<128xf32, #tpu.memory_space<smem>>
    %95 = arith.mulf %93, %94 : f32
    %c36_28 = arith.constant 36 : index
    %96 = memref.load %arg4[%c36_28] : memref<128xf32, #tpu.memory_space<smem>>
    %c4_29 = arith.constant 4 : index
    %97 = memref.load %arg4[%c4_29] : memref<128xf32, #tpu.memory_space<smem>>
    %98 = arith.mulf %96, %97 : f32
    %c37 = arith.constant 37 : index
    %99 = memref.load %arg4[%c37] : memref<128xf32, #tpu.memory_space<smem>>
    %c1_30 = arith.constant 1 : index
    %100 = memref.load %arg4[%c1_30] : memref<128xf32, #tpu.memory_space<smem>>
    %101 = arith.mulf %99, %100 : f32
    %102 = arith.addf %95, %101 : f32
    %c5_31 = arith.constant 5 : index
    %103 = memref.load %arg4[%c5_31] : memref<128xf32, #tpu.memory_space<smem>>
    %104 = arith.mulf %99, %103 : f32
    %105 = arith.addf %98, %104 : f32
    %c38 = arith.constant 38 : index
    %106 = memref.load %arg4[%c38] : memref<128xf32, #tpu.memory_space<smem>>
    %c2_32 = arith.constant 2 : index
    %107 = memref.load %arg4[%c2_32] : memref<128xf32, #tpu.memory_space<smem>>
    %108 = arith.mulf %106, %107 : f32
    %109 = arith.addf %102, %108 : f32
    %c6_33 = arith.constant 6 : index
    %110 = memref.load %arg4[%c6_33] : memref<128xf32, #tpu.memory_space<smem>>
    %111 = arith.mulf %106, %110 : f32
    %112 = arith.addf %105, %111 : f32
    %c39 = arith.constant 39 : index
    %113 = memref.load %arg4[%c39] : memref<128xf32, #tpu.memory_space<smem>>
    %c3_34 = arith.constant 3 : index
    %114 = memref.load %arg4[%c3_34] : memref<128xf32, #tpu.memory_space<smem>>
    %115 = arith.mulf %113, %114 : f32
    %116 = arith.addf %109, %115 : f32
    %c7_35 = arith.constant 7 : index
    %117 = memref.load %arg4[%c7_35] : memref<128xf32, #tpu.memory_space<smem>>
    %118 = arith.mulf %113, %117 : f32
    %119 = arith.addf %112, %118 : f32
    %c75 = arith.constant 75 : index
    %120 = memref.load %arg4[%c75] : memref<128xf32, #tpu.memory_space<smem>>
    %121 = arith.addf %119, %120 : f32
    %c40 = arith.constant 40 : index
    %122 = memref.load %arg4[%c40] : memref<128xf32, #tpu.memory_space<smem>>
    %c8_36 = arith.constant 8 : index
    %123 = memref.load %arg4[%c8_36] : memref<128xf32, #tpu.memory_space<smem>>
    %124 = arith.mulf %122, %123 : f32
    %c40_37 = arith.constant 40 : index
    %125 = memref.load %arg4[%c40_37] : memref<128xf32, #tpu.memory_space<smem>>
    %c12 = arith.constant 12 : index
    %126 = memref.load %arg4[%c12] : memref<128xf32, #tpu.memory_space<smem>>
    %127 = arith.mulf %125, %126 : f32
    %c41 = arith.constant 41 : index
    %128 = memref.load %arg4[%c41] : memref<128xf32, #tpu.memory_space<smem>>
    %c9 = arith.constant 9 : index
    %129 = memref.load %arg4[%c9] : memref<128xf32, #tpu.memory_space<smem>>
    %130 = arith.mulf %128, %129 : f32
    %131 = arith.addf %124, %130 : f32
    %c13 = arith.constant 13 : index
    %132 = memref.load %arg4[%c13] : memref<128xf32, #tpu.memory_space<smem>>
    %133 = arith.mulf %128, %132 : f32
    %134 = arith.addf %127, %133 : f32
    %c42 = arith.constant 42 : index
    %135 = memref.load %arg4[%c42] : memref<128xf32, #tpu.memory_space<smem>>
    %c10 = arith.constant 10 : index
    %136 = memref.load %arg4[%c10] : memref<128xf32, #tpu.memory_space<smem>>
    %137 = arith.mulf %135, %136 : f32
    %138 = arith.addf %131, %137 : f32
    %c14 = arith.constant 14 : index
    %139 = memref.load %arg4[%c14] : memref<128xf32, #tpu.memory_space<smem>>
    %140 = arith.mulf %135, %139 : f32
    %141 = arith.addf %134, %140 : f32
    %c43 = arith.constant 43 : index
    %142 = memref.load %arg4[%c43] : memref<128xf32, #tpu.memory_space<smem>>
    %c11 = arith.constant 11 : index
    %143 = memref.load %arg4[%c11] : memref<128xf32, #tpu.memory_space<smem>>
    %144 = arith.mulf %142, %143 : f32
    %145 = arith.addf %138, %144 : f32
    %c15 = arith.constant 15 : index
    %146 = memref.load %arg4[%c15] : memref<128xf32, #tpu.memory_space<smem>>
    %147 = arith.mulf %142, %146 : f32
    %148 = arith.addf %141, %147 : f32
    %c76 = arith.constant 76 : index
    %149 = memref.load %arg4[%c76] : memref<128xf32, #tpu.memory_space<smem>>
    %150 = arith.addf %148, %149 : f32
    %c44 = arith.constant 44 : index
    %151 = memref.load %arg4[%c44] : memref<128xf32, #tpu.memory_space<smem>>
    %c8_38 = arith.constant 8 : index
    %152 = memref.load %arg4[%c8_38] : memref<128xf32, #tpu.memory_space<smem>>
    %153 = arith.mulf %151, %152 : f32
    %c44_39 = arith.constant 44 : index
    %154 = memref.load %arg4[%c44_39] : memref<128xf32, #tpu.memory_space<smem>>
    %c12_40 = arith.constant 12 : index
    %155 = memref.load %arg4[%c12_40] : memref<128xf32, #tpu.memory_space<smem>>
    %156 = arith.mulf %154, %155 : f32
    %c45 = arith.constant 45 : index
    %157 = memref.load %arg4[%c45] : memref<128xf32, #tpu.memory_space<smem>>
    %c9_41 = arith.constant 9 : index
    %158 = memref.load %arg4[%c9_41] : memref<128xf32, #tpu.memory_space<smem>>
    %159 = arith.mulf %157, %158 : f32
    %160 = arith.addf %153, %159 : f32
    %c13_42 = arith.constant 13 : index
    %161 = memref.load %arg4[%c13_42] : memref<128xf32, #tpu.memory_space<smem>>
    %162 = arith.mulf %157, %161 : f32
    %163 = arith.addf %156, %162 : f32
    %c46 = arith.constant 46 : index
    %164 = memref.load %arg4[%c46] : memref<128xf32, #tpu.memory_space<smem>>
    %c10_43 = arith.constant 10 : index
    %165 = memref.load %arg4[%c10_43] : memref<128xf32, #tpu.memory_space<smem>>
    %166 = arith.mulf %164, %165 : f32
    %167 = arith.addf %160, %166 : f32
    %c14_44 = arith.constant 14 : index
    %168 = memref.load %arg4[%c14_44] : memref<128xf32, #tpu.memory_space<smem>>
    %169 = arith.mulf %164, %168 : f32
    %170 = arith.addf %163, %169 : f32
    %c47 = arith.constant 47 : index
    %171 = memref.load %arg4[%c47] : memref<128xf32, #tpu.memory_space<smem>>
    %c11_45 = arith.constant 11 : index
    %172 = memref.load %arg4[%c11_45] : memref<128xf32, #tpu.memory_space<smem>>
    %173 = arith.mulf %171, %172 : f32
    %174 = arith.addf %167, %173 : f32
    %c15_46 = arith.constant 15 : index
    %175 = memref.load %arg4[%c15_46] : memref<128xf32, #tpu.memory_space<smem>>
    %176 = arith.mulf %171, %175 : f32
    %177 = arith.addf %170, %176 : f32
    %c77 = arith.constant 77 : index
    %178 = memref.load %arg4[%c77] : memref<128xf32, #tpu.memory_space<smem>>
    %179 = arith.addf %177, %178 : f32
    %c48 = arith.constant 48 : index
    %180 = memref.load %arg4[%c48] : memref<128xf32, #tpu.memory_space<smem>>
    %c8_47 = arith.constant 8 : index
    %181 = memref.load %arg4[%c8_47] : memref<128xf32, #tpu.memory_space<smem>>
    %182 = arith.mulf %180, %181 : f32
    %c48_48 = arith.constant 48 : index
    %183 = memref.load %arg4[%c48_48] : memref<128xf32, #tpu.memory_space<smem>>
    %c12_49 = arith.constant 12 : index
    %184 = memref.load %arg4[%c12_49] : memref<128xf32, #tpu.memory_space<smem>>
    %185 = arith.mulf %183, %184 : f32
    %c49 = arith.constant 49 : index
    %186 = memref.load %arg4[%c49] : memref<128xf32, #tpu.memory_space<smem>>
    %c9_50 = arith.constant 9 : index
    %187 = memref.load %arg4[%c9_50] : memref<128xf32, #tpu.memory_space<smem>>
    %188 = arith.mulf %186, %187 : f32
    %189 = arith.addf %182, %188 : f32
    %c13_51 = arith.constant 13 : index
    %190 = memref.load %arg4[%c13_51] : memref<128xf32, #tpu.memory_space<smem>>
    %191 = arith.mulf %186, %190 : f32
    %192 = arith.addf %185, %191 : f32
    %c50 = arith.constant 50 : index
    %193 = memref.load %arg4[%c50] : memref<128xf32, #tpu.memory_space<smem>>
    %c10_52 = arith.constant 10 : index
    %194 = memref.load %arg4[%c10_52] : memref<128xf32, #tpu.memory_space<smem>>
    %195 = arith.mulf %193, %194 : f32
    %196 = arith.addf %189, %195 : f32
    %c14_53 = arith.constant 14 : index
    %197 = memref.load %arg4[%c14_53] : memref<128xf32, #tpu.memory_space<smem>>
    %198 = arith.mulf %193, %197 : f32
    %199 = arith.addf %192, %198 : f32
    %c51 = arith.constant 51 : index
    %200 = memref.load %arg4[%c51] : memref<128xf32, #tpu.memory_space<smem>>
    %c11_54 = arith.constant 11 : index
    %201 = memref.load %arg4[%c11_54] : memref<128xf32, #tpu.memory_space<smem>>
    %202 = arith.mulf %200, %201 : f32
    %203 = arith.addf %196, %202 : f32
    %c15_55 = arith.constant 15 : index
    %204 = memref.load %arg4[%c15_55] : memref<128xf32, #tpu.memory_space<smem>>
    %205 = arith.mulf %200, %204 : f32
    %206 = arith.addf %199, %205 : f32
    %c78 = arith.constant 78 : index
    %207 = memref.load %arg4[%c78] : memref<128xf32, #tpu.memory_space<smem>>
    %208 = arith.addf %206, %207 : f32
    %c52 = arith.constant 52 : index
    %209 = memref.load %arg4[%c52] : memref<128xf32, #tpu.memory_space<smem>>
    %c8_56 = arith.constant 8 : index
    %210 = memref.load %arg4[%c8_56] : memref<128xf32, #tpu.memory_space<smem>>
    %211 = arith.mulf %209, %210 : f32
    %c52_57 = arith.constant 52 : index
    %212 = memref.load %arg4[%c52_57] : memref<128xf32, #tpu.memory_space<smem>>
    %c12_58 = arith.constant 12 : index
    %213 = memref.load %arg4[%c12_58] : memref<128xf32, #tpu.memory_space<smem>>
    %214 = arith.mulf %212, %213 : f32
    %c53 = arith.constant 53 : index
    %215 = memref.load %arg4[%c53] : memref<128xf32, #tpu.memory_space<smem>>
    %c9_59 = arith.constant 9 : index
    %216 = memref.load %arg4[%c9_59] : memref<128xf32, #tpu.memory_space<smem>>
    %217 = arith.mulf %215, %216 : f32
    %218 = arith.addf %211, %217 : f32
    %c13_60 = arith.constant 13 : index
    %219 = memref.load %arg4[%c13_60] : memref<128xf32, #tpu.memory_space<smem>>
    %220 = arith.mulf %215, %219 : f32
    %221 = arith.addf %214, %220 : f32
    %c54 = arith.constant 54 : index
    %222 = memref.load %arg4[%c54] : memref<128xf32, #tpu.memory_space<smem>>
    %c10_61 = arith.constant 10 : index
    %223 = memref.load %arg4[%c10_61] : memref<128xf32, #tpu.memory_space<smem>>
    %224 = arith.mulf %222, %223 : f32
    %225 = arith.addf %218, %224 : f32
    %c14_62 = arith.constant 14 : index
    %226 = memref.load %arg4[%c14_62] : memref<128xf32, #tpu.memory_space<smem>>
    %227 = arith.mulf %222, %226 : f32
    %228 = arith.addf %221, %227 : f32
    %c55 = arith.constant 55 : index
    %229 = memref.load %arg4[%c55] : memref<128xf32, #tpu.memory_space<smem>>
    %c11_63 = arith.constant 11 : index
    %230 = memref.load %arg4[%c11_63] : memref<128xf32, #tpu.memory_space<smem>>
    %231 = arith.mulf %229, %230 : f32
    %232 = arith.addf %225, %231 : f32
    %c15_64 = arith.constant 15 : index
    %233 = memref.load %arg4[%c15_64] : memref<128xf32, #tpu.memory_space<smem>>
    %234 = arith.mulf %229, %233 : f32
    %235 = arith.addf %228, %234 : f32
    %c79 = arith.constant 79 : index
    %236 = memref.load %arg4[%c79] : memref<128xf32, #tpu.memory_space<smem>>
    %237 = arith.addf %235, %236 : f32
    %c56 = arith.constant 56 : index
    %238 = memref.load %arg4[%c56] : memref<128xf32, #tpu.memory_space<smem>>
    %c16 = arith.constant 16 : index
    %239 = memref.load %arg4[%c16] : memref<128xf32, #tpu.memory_space<smem>>
    %240 = arith.mulf %238, %239 : f32
    %c56_65 = arith.constant 56 : index
    %241 = memref.load %arg4[%c56_65] : memref<128xf32, #tpu.memory_space<smem>>
    %c20 = arith.constant 20 : index
    %242 = memref.load %arg4[%c20] : memref<128xf32, #tpu.memory_space<smem>>
    %243 = arith.mulf %241, %242 : f32
    %c57 = arith.constant 57 : index
    %244 = memref.load %arg4[%c57] : memref<128xf32, #tpu.memory_space<smem>>
    %c17 = arith.constant 17 : index
    %245 = memref.load %arg4[%c17] : memref<128xf32, #tpu.memory_space<smem>>
    %246 = arith.mulf %244, %245 : f32
    %247 = arith.addf %240, %246 : f32
    %c21 = arith.constant 21 : index
    %248 = memref.load %arg4[%c21] : memref<128xf32, #tpu.memory_space<smem>>
    %249 = arith.mulf %244, %248 : f32
    %250 = arith.addf %243, %249 : f32
    %c58 = arith.constant 58 : index
    %251 = memref.load %arg4[%c58] : memref<128xf32, #tpu.memory_space<smem>>
    %c18 = arith.constant 18 : index
    %252 = memref.load %arg4[%c18] : memref<128xf32, #tpu.memory_space<smem>>
    %253 = arith.mulf %251, %252 : f32
    %254 = arith.addf %247, %253 : f32
    %c22 = arith.constant 22 : index
    %255 = memref.load %arg4[%c22] : memref<128xf32, #tpu.memory_space<smem>>
    %256 = arith.mulf %251, %255 : f32
    %257 = arith.addf %250, %256 : f32
    %c59 = arith.constant 59 : index
    %258 = memref.load %arg4[%c59] : memref<128xf32, #tpu.memory_space<smem>>
    %c19 = arith.constant 19 : index
    %259 = memref.load %arg4[%c19] : memref<128xf32, #tpu.memory_space<smem>>
    %260 = arith.mulf %258, %259 : f32
    %261 = arith.addf %254, %260 : f32
    %c23 = arith.constant 23 : index
    %262 = memref.load %arg4[%c23] : memref<128xf32, #tpu.memory_space<smem>>
    %263 = arith.mulf %258, %262 : f32
    %264 = arith.addf %257, %263 : f32
    %c80 = arith.constant 80 : index
    %265 = memref.load %arg4[%c80] : memref<128xf32, #tpu.memory_space<smem>>
    %266 = arith.addf %264, %265 : f32
    %c60 = arith.constant 60 : index
    %267 = memref.load %arg4[%c60] : memref<128xf32, #tpu.memory_space<smem>>
    %c16_66 = arith.constant 16 : index
    %268 = memref.load %arg4[%c16_66] : memref<128xf32, #tpu.memory_space<smem>>
    %269 = arith.mulf %267, %268 : f32
    %c60_67 = arith.constant 60 : index
    %270 = memref.load %arg4[%c60_67] : memref<128xf32, #tpu.memory_space<smem>>
    %c20_68 = arith.constant 20 : index
    %271 = memref.load %arg4[%c20_68] : memref<128xf32, #tpu.memory_space<smem>>
    %272 = arith.mulf %270, %271 : f32
    %c61 = arith.constant 61 : index
    %273 = memref.load %arg4[%c61] : memref<128xf32, #tpu.memory_space<smem>>
    %c17_69 = arith.constant 17 : index
    %274 = memref.load %arg4[%c17_69] : memref<128xf32, #tpu.memory_space<smem>>
    %275 = arith.mulf %273, %274 : f32
    %276 = arith.addf %269, %275 : f32
    %c21_70 = arith.constant 21 : index
    %277 = memref.load %arg4[%c21_70] : memref<128xf32, #tpu.memory_space<smem>>
    %278 = arith.mulf %273, %277 : f32
    %279 = arith.addf %272, %278 : f32
    %c62 = arith.constant 62 : index
    %280 = memref.load %arg4[%c62] : memref<128xf32, #tpu.memory_space<smem>>
    %c18_71 = arith.constant 18 : index
    %281 = memref.load %arg4[%c18_71] : memref<128xf32, #tpu.memory_space<smem>>
    %282 = arith.mulf %280, %281 : f32
    %283 = arith.addf %276, %282 : f32
    %c22_72 = arith.constant 22 : index
    %284 = memref.load %arg4[%c22_72] : memref<128xf32, #tpu.memory_space<smem>>
    %285 = arith.mulf %280, %284 : f32
    %286 = arith.addf %279, %285 : f32
    %c63 = arith.constant 63 : index
    %287 = memref.load %arg4[%c63] : memref<128xf32, #tpu.memory_space<smem>>
    %c19_73 = arith.constant 19 : index
    %288 = memref.load %arg4[%c19_73] : memref<128xf32, #tpu.memory_space<smem>>
    %289 = arith.mulf %287, %288 : f32
    %290 = arith.addf %283, %289 : f32
    %c23_74 = arith.constant 23 : index
    %291 = memref.load %arg4[%c23_74] : memref<128xf32, #tpu.memory_space<smem>>
    %292 = arith.mulf %287, %291 : f32
    %293 = arith.addf %286, %292 : f32
    %c81 = arith.constant 81 : index
    %294 = memref.load %arg4[%c81] : memref<128xf32, #tpu.memory_space<smem>>
    %295 = arith.addf %293, %294 : f32
    %c64 = arith.constant 64 : index
    %296 = memref.load %arg4[%c64] : memref<128xf32, #tpu.memory_space<smem>>
    %c16_75 = arith.constant 16 : index
    %297 = memref.load %arg4[%c16_75] : memref<128xf32, #tpu.memory_space<smem>>
    %298 = arith.mulf %296, %297 : f32
    %c64_76 = arith.constant 64 : index
    %299 = memref.load %arg4[%c64_76] : memref<128xf32, #tpu.memory_space<smem>>
    %c20_77 = arith.constant 20 : index
    %300 = memref.load %arg4[%c20_77] : memref<128xf32, #tpu.memory_space<smem>>
    %301 = arith.mulf %299, %300 : f32
    %c65 = arith.constant 65 : index
    %302 = memref.load %arg4[%c65] : memref<128xf32, #tpu.memory_space<smem>>
    %c17_78 = arith.constant 17 : index
    %303 = memref.load %arg4[%c17_78] : memref<128xf32, #tpu.memory_space<smem>>
    %304 = arith.mulf %302, %303 : f32
    %305 = arith.addf %298, %304 : f32
    %c21_79 = arith.constant 21 : index
    %306 = memref.load %arg4[%c21_79] : memref<128xf32, #tpu.memory_space<smem>>
    %307 = arith.mulf %302, %306 : f32
    %308 = arith.addf %301, %307 : f32
    %c66 = arith.constant 66 : index
    %309 = memref.load %arg4[%c66] : memref<128xf32, #tpu.memory_space<smem>>
    %c18_80 = arith.constant 18 : index
    %310 = memref.load %arg4[%c18_80] : memref<128xf32, #tpu.memory_space<smem>>
    %311 = arith.mulf %309, %310 : f32
    %312 = arith.addf %305, %311 : f32
    %c22_81 = arith.constant 22 : index
    %313 = memref.load %arg4[%c22_81] : memref<128xf32, #tpu.memory_space<smem>>
    %314 = arith.mulf %309, %313 : f32
    %315 = arith.addf %308, %314 : f32
    %c67 = arith.constant 67 : index
    %316 = memref.load %arg4[%c67] : memref<128xf32, #tpu.memory_space<smem>>
    %c19_82 = arith.constant 19 : index
    %317 = memref.load %arg4[%c19_82] : memref<128xf32, #tpu.memory_space<smem>>
    %318 = arith.mulf %316, %317 : f32
    %319 = arith.addf %312, %318 : f32
    %c23_83 = arith.constant 23 : index
    %320 = memref.load %arg4[%c23_83] : memref<128xf32, #tpu.memory_space<smem>>
    %321 = arith.mulf %316, %320 : f32
    %322 = arith.addf %315, %321 : f32
    %c82 = arith.constant 82 : index
    %323 = memref.load %arg4[%c82] : memref<128xf32, #tpu.memory_space<smem>>
    %324 = arith.addf %322, %323 : f32
    %c68 = arith.constant 68 : index
    %325 = memref.load %arg4[%c68] : memref<128xf32, #tpu.memory_space<smem>>
    %c16_84 = arith.constant 16 : index
    %326 = memref.load %arg4[%c16_84] : memref<128xf32, #tpu.memory_space<smem>>
    %327 = arith.mulf %325, %326 : f32
    %c68_85 = arith.constant 68 : index
    %328 = memref.load %arg4[%c68_85] : memref<128xf32, #tpu.memory_space<smem>>
    %c20_86 = arith.constant 20 : index
    %329 = memref.load %arg4[%c20_86] : memref<128xf32, #tpu.memory_space<smem>>
    %330 = arith.mulf %328, %329 : f32
    %c69 = arith.constant 69 : index
    %331 = memref.load %arg4[%c69] : memref<128xf32, #tpu.memory_space<smem>>
    %c17_87 = arith.constant 17 : index
    %332 = memref.load %arg4[%c17_87] : memref<128xf32, #tpu.memory_space<smem>>
    %333 = arith.mulf %331, %332 : f32
    %334 = arith.addf %327, %333 : f32
    %c21_88 = arith.constant 21 : index
    %335 = memref.load %arg4[%c21_88] : memref<128xf32, #tpu.memory_space<smem>>
    %336 = arith.mulf %331, %335 : f32
    %337 = arith.addf %330, %336 : f32
    %c70 = arith.constant 70 : index
    %338 = memref.load %arg4[%c70] : memref<128xf32, #tpu.memory_space<smem>>
    %c18_89 = arith.constant 18 : index
    %339 = memref.load %arg4[%c18_89] : memref<128xf32, #tpu.memory_space<smem>>
    %340 = arith.mulf %338, %339 : f32
    %341 = arith.addf %334, %340 : f32
    %c22_90 = arith.constant 22 : index
    %342 = memref.load %arg4[%c22_90] : memref<128xf32, #tpu.memory_space<smem>>
    %343 = arith.mulf %338, %342 : f32
    %344 = arith.addf %337, %343 : f32
    %c71 = arith.constant 71 : index
    %345 = memref.load %arg4[%c71] : memref<128xf32, #tpu.memory_space<smem>>
    %c19_91 = arith.constant 19 : index
    %346 = memref.load %arg4[%c19_91] : memref<128xf32, #tpu.memory_space<smem>>
    %347 = arith.mulf %345, %346 : f32
    %348 = arith.addf %341, %347 : f32
    %c23_92 = arith.constant 23 : index
    %349 = memref.load %arg4[%c23_92] : memref<128xf32, #tpu.memory_space<smem>>
    %350 = arith.mulf %345, %349 : f32
    %351 = arith.addf %344, %350 : f32
    %c83 = arith.constant 83 : index
    %352 = memref.load %arg4[%c83] : memref<128xf32, #tpu.memory_space<smem>>
    %353 = arith.addf %351, %352 : f32
    %354 = vector.broadcast %29 : f32 to vector<2x32xf32>
    %355 = arith.mulf %2, %354 : vector<2x32xf32>
    %356 = vector.broadcast %34 : f32 to vector<2x32xf32>
    %357 = arith.addf %355, %356 : vector<2x32xf32>
    %358 = vector.broadcast %58 : f32 to vector<2x32xf32>
    %359 = arith.mulf %2, %358 : vector<2x32xf32>
    %360 = vector.broadcast %63 : f32 to vector<2x32xf32>
    %361 = arith.addf %359, %360 : vector<2x32xf32>
    %362 = vector.broadcast %87 : f32 to vector<2x32xf32>
    %363 = arith.mulf %2, %362 : vector<2x32xf32>
    %364 = vector.broadcast %92 : f32 to vector<2x32xf32>
    %365 = arith.addf %363, %364 : vector<2x32xf32>
    %366 = vector.broadcast %116 : f32 to vector<2x32xf32>
    %367 = arith.mulf %2, %366 : vector<2x32xf32>
    %368 = vector.broadcast %121 : f32 to vector<2x32xf32>
    %369 = arith.addf %367, %368 : vector<2x32xf32>
    %370 = vector.broadcast %145 : f32 to vector<2x32xf32>
    %371 = arith.mulf %5, %370 : vector<2x32xf32>
    %372 = vector.broadcast %150 : f32 to vector<2x32xf32>
    %373 = arith.addf %371, %372 : vector<2x32xf32>
    %374 = vector.broadcast %174 : f32 to vector<2x32xf32>
    %375 = arith.mulf %5, %374 : vector<2x32xf32>
    %376 = vector.broadcast %179 : f32 to vector<2x32xf32>
    %377 = arith.addf %375, %376 : vector<2x32xf32>
    %378 = vector.broadcast %203 : f32 to vector<2x32xf32>
    %379 = arith.mulf %5, %378 : vector<2x32xf32>
    %380 = vector.broadcast %208 : f32 to vector<2x32xf32>
    %381 = arith.addf %379, %380 : vector<2x32xf32>
    %382 = vector.broadcast %232 : f32 to vector<2x32xf32>
    %383 = arith.mulf %5, %382 : vector<2x32xf32>
    %384 = vector.broadcast %237 : f32 to vector<2x32xf32>
    %385 = arith.addf %383, %384 : vector<2x32xf32>
    %386 = vector.broadcast %261 : f32 to vector<2x32xf32>
    %387 = arith.mulf %5, %386 : vector<2x32xf32>
    %388 = vector.broadcast %266 : f32 to vector<2x32xf32>
    %389 = arith.addf %387, %388 : vector<2x32xf32>
    %390 = vector.broadcast %290 : f32 to vector<2x32xf32>
    %391 = arith.mulf %5, %390 : vector<2x32xf32>
    %392 = vector.broadcast %295 : f32 to vector<2x32xf32>
    %393 = arith.addf %391, %392 : vector<2x32xf32>
    %394 = vector.broadcast %319 : f32 to vector<2x32xf32>
    %395 = arith.mulf %5, %394 : vector<2x32xf32>
    %396 = vector.broadcast %324 : f32 to vector<2x32xf32>
    %397 = arith.addf %395, %396 : vector<2x32xf32>
    %398 = vector.broadcast %348 : f32 to vector<2x32xf32>
    %399 = arith.mulf %5, %398 : vector<2x32xf32>
    %400 = vector.broadcast %353 : f32 to vector<2x32xf32>
    %401 = arith.addf %399, %400 : vector<2x32xf32>
    %cst_93 = arith.constant dense<0xFF800000> : vector<32xf32>
    %402 = vector.multi_reduction <maximumf>, %373, %cst_93 [0] : vector<2x32xf32> to vector<32xf32>
    %403 = vector.shape_cast %402 : vector<32xf32> to vector<1x32xf32>
    %cst_94 = arith.constant dense<0x7F800000> : vector<32xf32>
    %404 = vector.multi_reduction <minimumf>, %373, %cst_94 [0] : vector<2x32xf32> to vector<32xf32>
    %405 = vector.shape_cast %404 : vector<32xf32> to vector<1x32xf32>
    %cst_95 = arith.constant 0.000000e+00 : f32
    %406 = vector.broadcast %cst_95 : f32 to vector<2x32xf32>
    %407 = arith.cmpf oge, %357, %406 : vector<2x32xf32>
    %408 = vector.broadcast %403 : vector<1x32xf32> to vector<2x32xf32>
    %409 = arith.mulf %357, %408 : vector<2x32xf32>
    %410 = vector.broadcast %405 : vector<1x32xf32> to vector<2x32xf32>
    %411 = arith.mulf %357, %410 : vector<2x32xf32>
    %412 = arith.select %407, %409, %411 : vector<2x32xi1>, vector<2x32xf32>
    %413 = vector.shape_cast %357 : vector<2x32xf32> to vector<2x1x32xf32>
    %414 = vector.shape_cast %373 : vector<2x32xf32> to vector<1x2x32xf32>
    %415 = vector.broadcast %413 : vector<2x1x32xf32> to vector<2x2x32xf32>
    %416 = vector.broadcast %414 : vector<1x2x32xf32> to vector<2x2x32xf32>
    %417 = arith.mulf %415, %416 : vector<2x2x32xf32>
    %418 = vector.shape_cast %412 : vector<2x32xf32> to vector<2x1x32xf32>
    %419 = vector.broadcast %418 : vector<2x1x32xf32> to vector<2x2x32xf32>
    %420 = arith.subf %417, %419 : vector<2x2x32xf32>
    %421 = math.exp %420 : vector<2x2x32xf32>
    %422 = vector.shape_cast %389 : vector<2x32xf32> to vector<1x2x32xf32>
    %423 = vector.broadcast %422 : vector<1x2x32xf32> to vector<2x2x32xf32>
    %424 = arith.mulf %421, %423 : vector<2x2x32xf32>
    %cst_96 = arith.constant dense<0.000000e+00> : vector<2x32xf32>
    %425 = vector.multi_reduction <add>, %424, %cst_96 [1] : vector<2x2x32xf32> to vector<2x32xf32>
    %cst_97 = arith.constant dense<0.000000e+00> : vector<2x32xf32>
    %426 = vector.multi_reduction <add>, %421, %cst_97 [1] : vector<2x2x32xf32> to vector<2x32xf32>
    %427 = tpu.reciprocal %426 {approx = true} : vector<2x32xf32> -> vector<2x32xf32>
    %428 = arith.mulf %425, %427 : vector<2x32xf32>
    %cst_98 = arith.constant dense<0xFF800000> : vector<32xf32>
    %429 = vector.multi_reduction <maximumf>, %377, %cst_98 [0] : vector<2x32xf32> to vector<32xf32>
    %430 = vector.shape_cast %429 : vector<32xf32> to vector<1x32xf32>
    %cst_99 = arith.constant dense<0x7F800000> : vector<32xf32>
    %431 = vector.multi_reduction <minimumf>, %377, %cst_99 [0] : vector<2x32xf32> to vector<32xf32>
    %432 = vector.shape_cast %431 : vector<32xf32> to vector<1x32xf32>
    %cst_100 = arith.constant 0.000000e+00 : f32
    %433 = vector.broadcast %cst_100 : f32 to vector<2x32xf32>
    %434 = arith.cmpf oge, %361, %433 : vector<2x32xf32>
    %435 = vector.broadcast %430 : vector<1x32xf32> to vector<2x32xf32>
    %436 = arith.mulf %361, %435 : vector<2x32xf32>
    %437 = vector.broadcast %432 : vector<1x32xf32> to vector<2x32xf32>
    %438 = arith.mulf %361, %437 : vector<2x32xf32>
    %439 = arith.select %434, %436, %438 : vector<2x32xi1>, vector<2x32xf32>
    %440 = vector.shape_cast %361 : vector<2x32xf32> to vector<2x1x32xf32>
    %441 = vector.shape_cast %377 : vector<2x32xf32> to vector<1x2x32xf32>
    %442 = vector.broadcast %440 : vector<2x1x32xf32> to vector<2x2x32xf32>
    %443 = vector.broadcast %441 : vector<1x2x32xf32> to vector<2x2x32xf32>
    %444 = arith.mulf %442, %443 : vector<2x2x32xf32>
    %445 = vector.shape_cast %439 : vector<2x32xf32> to vector<2x1x32xf32>
    %446 = vector.broadcast %445 : vector<2x1x32xf32> to vector<2x2x32xf32>
    %447 = arith.subf %444, %446 : vector<2x2x32xf32>
    %448 = math.exp %447 : vector<2x2x32xf32>
    %449 = vector.shape_cast %393 : vector<2x32xf32> to vector<1x2x32xf32>
    %450 = vector.broadcast %449 : vector<1x2x32xf32> to vector<2x2x32xf32>
    %451 = arith.mulf %448, %450 : vector<2x2x32xf32>
    %cst_101 = arith.constant dense<0.000000e+00> : vector<2x32xf32>
    %452 = vector.multi_reduction <add>, %451, %cst_101 [1] : vector<2x2x32xf32> to vector<2x32xf32>
    %cst_102 = arith.constant dense<0.000000e+00> : vector<2x32xf32>
    %453 = vector.multi_reduction <add>, %448, %cst_102 [1] : vector<2x2x32xf32> to vector<2x32xf32>
    %454 = tpu.reciprocal %453 {approx = true} : vector<2x32xf32> -> vector<2x32xf32>
    %455 = arith.mulf %452, %454 : vector<2x32xf32>
    %cst_103 = arith.constant dense<0xFF800000> : vector<32xf32>
    %456 = vector.multi_reduction <maximumf>, %381, %cst_103 [0] : vector<2x32xf32> to vector<32xf32>
    %457 = vector.shape_cast %456 : vector<32xf32> to vector<1x32xf32>
    %cst_104 = arith.constant dense<0x7F800000> : vector<32xf32>
    %458 = vector.multi_reduction <minimumf>, %381, %cst_104 [0] : vector<2x32xf32> to vector<32xf32>
    %459 = vector.shape_cast %458 : vector<32xf32> to vector<1x32xf32>
    %cst_105 = arith.constant 0.000000e+00 : f32
    %460 = vector.broadcast %cst_105 : f32 to vector<2x32xf32>
    %461 = arith.cmpf oge, %365, %460 : vector<2x32xf32>
    %462 = vector.broadcast %457 : vector<1x32xf32> to vector<2x32xf32>
    %463 = arith.mulf %365, %462 : vector<2x32xf32>
    %464 = vector.broadcast %459 : vector<1x32xf32> to vector<2x32xf32>
    %465 = arith.mulf %365, %464 : vector<2x32xf32>
    %466 = arith.select %461, %463, %465 : vector<2x32xi1>, vector<2x32xf32>
    %467 = vector.shape_cast %365 : vector<2x32xf32> to vector<2x1x32xf32>
    %468 = vector.shape_cast %381 : vector<2x32xf32> to vector<1x2x32xf32>
    %469 = vector.broadcast %467 : vector<2x1x32xf32> to vector<2x2x32xf32>
    %470 = vector.broadcast %468 : vector<1x2x32xf32> to vector<2x2x32xf32>
    %471 = arith.mulf %469, %470 : vector<2x2x32xf32>
    %472 = vector.shape_cast %466 : vector<2x32xf32> to vector<2x1x32xf32>
    %473 = vector.broadcast %472 : vector<2x1x32xf32> to vector<2x2x32xf32>
    %474 = arith.subf %471, %473 : vector<2x2x32xf32>
    %475 = math.exp %474 : vector<2x2x32xf32>
    %476 = vector.shape_cast %397 : vector<2x32xf32> to vector<1x2x32xf32>
    %477 = vector.broadcast %476 : vector<1x2x32xf32> to vector<2x2x32xf32>
    %478 = arith.mulf %475, %477 : vector<2x2x32xf32>
    %cst_106 = arith.constant dense<0.000000e+00> : vector<2x32xf32>
    %479 = vector.multi_reduction <add>, %478, %cst_106 [1] : vector<2x2x32xf32> to vector<2x32xf32>
    %cst_107 = arith.constant dense<0.000000e+00> : vector<2x32xf32>
    %480 = vector.multi_reduction <add>, %475, %cst_107 [1] : vector<2x2x32xf32> to vector<2x32xf32>
    %481 = tpu.reciprocal %480 {approx = true} : vector<2x32xf32> -> vector<2x32xf32>
    %482 = arith.mulf %479, %481 : vector<2x32xf32>
    %cst_108 = arith.constant dense<0xFF800000> : vector<32xf32>
    %483 = vector.multi_reduction <maximumf>, %385, %cst_108 [0] : vector<2x32xf32> to vector<32xf32>
    %484 = vector.shape_cast %483 : vector<32xf32> to vector<1x32xf32>
    %cst_109 = arith.constant dense<0x7F800000> : vector<32xf32>
    %485 = vector.multi_reduction <minimumf>, %385, %cst_109 [0] : vector<2x32xf32> to vector<32xf32>
    %486 = vector.shape_cast %485 : vector<32xf32> to vector<1x32xf32>
    %cst_110 = arith.constant 0.000000e+00 : f32
    %487 = vector.broadcast %cst_110 : f32 to vector<2x32xf32>
    %488 = arith.cmpf oge, %369, %487 : vector<2x32xf32>
    %489 = vector.broadcast %484 : vector<1x32xf32> to vector<2x32xf32>
    %490 = arith.mulf %369, %489 : vector<2x32xf32>
    %491 = vector.broadcast %486 : vector<1x32xf32> to vector<2x32xf32>
    %492 = arith.mulf %369, %491 : vector<2x32xf32>
    %493 = arith.select %488, %490, %492 : vector<2x32xi1>, vector<2x32xf32>
    %494 = vector.shape_cast %369 : vector<2x32xf32> to vector<2x1x32xf32>
    %495 = vector.shape_cast %385 : vector<2x32xf32> to vector<1x2x32xf32>
    %496 = vector.broadcast %494 : vector<2x1x32xf32> to vector<2x2x32xf32>
    %497 = vector.broadcast %495 : vector<1x2x32xf32> to vector<2x2x32xf32>
    %498 = arith.mulf %496, %497 : vector<2x2x32xf32>
    %499 = vector.shape_cast %493 : vector<2x32xf32> to vector<2x1x32xf32>
    %500 = vector.broadcast %499 : vector<2x1x32xf32> to vector<2x2x32xf32>
    %501 = arith.subf %498, %500 : vector<2x2x32xf32>
    %502 = math.exp %501 : vector<2x2x32xf32>
    %503 = vector.shape_cast %401 : vector<2x32xf32> to vector<1x2x32xf32>
    %504 = vector.broadcast %503 : vector<1x2x32xf32> to vector<2x2x32xf32>
    %505 = arith.mulf %502, %504 : vector<2x2x32xf32>
    %cst_111 = arith.constant dense<0.000000e+00> : vector<2x32xf32>
    %506 = vector.multi_reduction <add>, %505, %cst_111 [1] : vector<2x2x32xf32> to vector<2x32xf32>
    %cst_112 = arith.constant dense<0.000000e+00> : vector<2x32xf32>
    %507 = vector.multi_reduction <add>, %502, %cst_112 [1] : vector<2x2x32xf32> to vector<2x32xf32>
    %508 = tpu.reciprocal %507 {approx = true} : vector<2x32xf32> -> vector<2x32xf32>
    %509 = arith.mulf %506, %508 : vector<2x32xf32>
    %c84 = arith.constant 84 : index
    %510 = memref.load %arg4[%c84] : memref<128xf32, #tpu.memory_space<smem>>
    %511 = vector.broadcast %510 : f32 to vector<2x32xf32>
    %512 = arith.mulf %428, %511 : vector<2x32xf32>
    %c85 = arith.constant 85 : index
    %513 = memref.load %arg4[%c85] : memref<128xf32, #tpu.memory_space<smem>>
    %514 = vector.broadcast %513 : f32 to vector<2x32xf32>
    %515 = arith.mulf %455, %514 : vector<2x32xf32>
    %516 = arith.addf %512, %515 : vector<2x32xf32>
    %c86 = arith.constant 86 : index
    %517 = memref.load %arg4[%c86] : memref<128xf32, #tpu.memory_space<smem>>
    %518 = vector.broadcast %517 : f32 to vector<2x32xf32>
    %519 = arith.mulf %482, %518 : vector<2x32xf32>
    %520 = arith.addf %516, %519 : vector<2x32xf32>
    %c87 = arith.constant 87 : index
    %521 = memref.load %arg4[%c87] : memref<128xf32, #tpu.memory_space<smem>>
    %522 = vector.broadcast %521 : f32 to vector<2x32xf32>
    %523 = arith.mulf %509, %522 : vector<2x32xf32>
    %524 = arith.addf %520, %523 : vector<2x32xf32>
    %c100 = arith.constant 100 : index
    %525 = memref.load %arg4[%c100] : memref<128xf32, #tpu.memory_space<smem>>
    %526 = vector.broadcast %525 : f32 to vector<2x32xf32>
    %527 = arith.addf %524, %526 : vector<2x32xf32>
    %c88 = arith.constant 88 : index
    %528 = memref.load %arg4[%c88] : memref<128xf32, #tpu.memory_space<smem>>
    %529 = vector.broadcast %528 : f32 to vector<2x32xf32>
    %530 = arith.mulf %428, %529 : vector<2x32xf32>
    %c89 = arith.constant 89 : index
    %531 = memref.load %arg4[%c89] : memref<128xf32, #tpu.memory_space<smem>>
    %532 = vector.broadcast %531 : f32 to vector<2x32xf32>
    %533 = arith.mulf %455, %532 : vector<2x32xf32>
    %534 = arith.addf %530, %533 : vector<2x32xf32>
    %c90 = arith.constant 90 : index
    %535 = memref.load %arg4[%c90] : memref<128xf32, #tpu.memory_space<smem>>
    %536 = vector.broadcast %535 : f32 to vector<2x32xf32>
    %537 = arith.mulf %482, %536 : vector<2x32xf32>
    %538 = arith.addf %534, %537 : vector<2x32xf32>
    %c91 = arith.constant 91 : index
    %539 = memref.load %arg4[%c91] : memref<128xf32, #tpu.memory_space<smem>>
    %540 = vector.broadcast %539 : f32 to vector<2x32xf32>
    %541 = arith.mulf %509, %540 : vector<2x32xf32>
    %542 = arith.addf %538, %541 : vector<2x32xf32>
    %c101 = arith.constant 101 : index
    %543 = memref.load %arg4[%c101] : memref<128xf32, #tpu.memory_space<smem>>
    %544 = vector.broadcast %543 : f32 to vector<2x32xf32>
    %545 = arith.addf %542, %544 : vector<2x32xf32>
    %c92 = arith.constant 92 : index
    %546 = memref.load %arg4[%c92] : memref<128xf32, #tpu.memory_space<smem>>
    %547 = vector.broadcast %546 : f32 to vector<2x32xf32>
    %548 = arith.mulf %428, %547 : vector<2x32xf32>
    %c93 = arith.constant 93 : index
    %549 = memref.load %arg4[%c93] : memref<128xf32, #tpu.memory_space<smem>>
    %550 = vector.broadcast %549 : f32 to vector<2x32xf32>
    %551 = arith.mulf %455, %550 : vector<2x32xf32>
    %552 = arith.addf %548, %551 : vector<2x32xf32>
    %c94 = arith.constant 94 : index
    %553 = memref.load %arg4[%c94] : memref<128xf32, #tpu.memory_space<smem>>
    %554 = vector.broadcast %553 : f32 to vector<2x32xf32>
    %555 = arith.mulf %482, %554 : vector<2x32xf32>
    %556 = arith.addf %552, %555 : vector<2x32xf32>
    %c95 = arith.constant 95 : index
    %557 = memref.load %arg4[%c95] : memref<128xf32, #tpu.memory_space<smem>>
    %558 = vector.broadcast %557 : f32 to vector<2x32xf32>
    %559 = arith.mulf %509, %558 : vector<2x32xf32>
    %560 = arith.addf %556, %559 : vector<2x32xf32>
    %c102 = arith.constant 102 : index
    %561 = memref.load %arg4[%c102] : memref<128xf32, #tpu.memory_space<smem>>
    %562 = vector.broadcast %561 : f32 to vector<2x32xf32>
    %563 = arith.addf %560, %562 : vector<2x32xf32>
    %c96 = arith.constant 96 : index
    %564 = memref.load %arg4[%c96] : memref<128xf32, #tpu.memory_space<smem>>
    %565 = vector.broadcast %564 : f32 to vector<2x32xf32>
    %566 = arith.mulf %428, %565 : vector<2x32xf32>
    %c97 = arith.constant 97 : index
    %567 = memref.load %arg4[%c97] : memref<128xf32, #tpu.memory_space<smem>>
    %568 = vector.broadcast %567 : f32 to vector<2x32xf32>
    %569 = arith.mulf %455, %568 : vector<2x32xf32>
    %570 = arith.addf %566, %569 : vector<2x32xf32>
    %c98 = arith.constant 98 : index
    %571 = memref.load %arg4[%c98] : memref<128xf32, #tpu.memory_space<smem>>
    %572 = vector.broadcast %571 : f32 to vector<2x32xf32>
    %573 = arith.mulf %482, %572 : vector<2x32xf32>
    %574 = arith.addf %570, %573 : vector<2x32xf32>
    %c99 = arith.constant 99 : index
    %575 = memref.load %arg4[%c99] : memref<128xf32, #tpu.memory_space<smem>>
    %576 = vector.broadcast %575 : f32 to vector<2x32xf32>
    %577 = arith.mulf %509, %576 : vector<2x32xf32>
    %578 = arith.addf %574, %577 : vector<2x32xf32>
    %c103 = arith.constant 103 : index
    %579 = memref.load %arg4[%c103] : memref<128xf32, #tpu.memory_space<smem>>
    %580 = vector.broadcast %579 : f32 to vector<2x32xf32>
    %581 = arith.addf %578, %580 : vector<2x32xf32>
    %582 = arith.addf %527, %545 : vector<2x32xf32>
    %583 = arith.addf %582, %563 : vector<2x32xf32>
    %584 = arith.addf %583, %581 : vector<2x32xf32>
    %cst_113 = arith.constant 2.500000e-01 : f32
    %585 = vector.broadcast %cst_113 : f32 to vector<2x32xf32>
    %586 = arith.mulf %584, %585 : vector<2x32xf32>
    %587 = arith.subf %527, %586 : vector<2x32xf32>
    %588 = arith.subf %545, %586 : vector<2x32xf32>
    %589 = arith.subf %563, %586 : vector<2x32xf32>
    %590 = arith.subf %581, %586 : vector<2x32xf32>
    %591 = arith.mulf %587, %587 : vector<2x32xf32>
    %592 = arith.mulf %588, %588 : vector<2x32xf32>
    %593 = arith.addf %591, %592 : vector<2x32xf32>
    %594 = arith.mulf %589, %589 : vector<2x32xf32>
    %595 = arith.addf %593, %594 : vector<2x32xf32>
    %596 = arith.mulf %590, %590 : vector<2x32xf32>
    %597 = arith.addf %595, %596 : vector<2x32xf32>
    %cst_114 = arith.constant 2.500000e-01 : f32
    %598 = vector.broadcast %cst_114 : f32 to vector<2x32xf32>
    %599 = arith.mulf %597, %598 : vector<2x32xf32>
    %cst_115 = arith.constant 9.99999974E-6 : f32
    %600 = vector.broadcast %cst_115 : f32 to vector<2x32xf32>
    %601 = arith.addf %599, %600 : vector<2x32xf32>
    %602 = math.rsqrt %601 : vector<2x32xf32>
    %603 = arith.mulf %587, %602 : vector<2x32xf32>
    %c104 = arith.constant 104 : index
    %604 = memref.load %arg4[%c104] : memref<128xf32, #tpu.memory_space<smem>>
    %605 = vector.broadcast %604 : f32 to vector<2x32xf32>
    %606 = arith.mulf %603, %605 : vector<2x32xf32>
    %c108 = arith.constant 108 : index
    %607 = memref.load %arg4[%c108] : memref<128xf32, #tpu.memory_space<smem>>
    %608 = vector.broadcast %607 : f32 to vector<2x32xf32>
    %609 = arith.addf %606, %608 : vector<2x32xf32>
    %c112 = arith.constant 112 : index
    %610 = memref.load %arg4[%c112] : memref<128xf32, #tpu.memory_space<smem>>
    %611 = vector.broadcast %610 : f32 to vector<2x32xf32>
    %612 = arith.mulf %609, %611 : vector<2x32xf32>
    %613 = arith.mulf %588, %602 : vector<2x32xf32>
    %c105 = arith.constant 105 : index
    %614 = memref.load %arg4[%c105] : memref<128xf32, #tpu.memory_space<smem>>
    %615 = vector.broadcast %614 : f32 to vector<2x32xf32>
    %616 = arith.mulf %613, %615 : vector<2x32xf32>
    %c109 = arith.constant 109 : index
    %617 = memref.load %arg4[%c109] : memref<128xf32, #tpu.memory_space<smem>>
    %618 = vector.broadcast %617 : f32 to vector<2x32xf32>
    %619 = arith.addf %616, %618 : vector<2x32xf32>
    %c113 = arith.constant 113 : index
    %620 = memref.load %arg4[%c113] : memref<128xf32, #tpu.memory_space<smem>>
    %621 = vector.broadcast %620 : f32 to vector<2x32xf32>
    %622 = arith.mulf %619, %621 : vector<2x32xf32>
    %623 = arith.addf %612, %622 : vector<2x32xf32>
    %624 = arith.mulf %589, %602 : vector<2x32xf32>
    %c106 = arith.constant 106 : index
    %625 = memref.load %arg4[%c106] : memref<128xf32, #tpu.memory_space<smem>>
    %626 = vector.broadcast %625 : f32 to vector<2x32xf32>
    %627 = arith.mulf %624, %626 : vector<2x32xf32>
    %c110 = arith.constant 110 : index
    %628 = memref.load %arg4[%c110] : memref<128xf32, #tpu.memory_space<smem>>
    %629 = vector.broadcast %628 : f32 to vector<2x32xf32>
    %630 = arith.addf %627, %629 : vector<2x32xf32>
    %c114 = arith.constant 114 : index
    %631 = memref.load %arg4[%c114] : memref<128xf32, #tpu.memory_space<smem>>
    %632 = vector.broadcast %631 : f32 to vector<2x32xf32>
    %633 = arith.mulf %630, %632 : vector<2x32xf32>
    %634 = arith.addf %623, %633 : vector<2x32xf32>
    %635 = arith.mulf %590, %602 : vector<2x32xf32>
    %c107 = arith.constant 107 : index
    %636 = memref.load %arg4[%c107] : memref<128xf32, #tpu.memory_space<smem>>
    %637 = vector.broadcast %636 : f32 to vector<2x32xf32>
    %638 = arith.mulf %635, %637 : vector<2x32xf32>
    %c111 = arith.constant 111 : index
    %639 = memref.load %arg4[%c111] : memref<128xf32, #tpu.memory_space<smem>>
    %640 = vector.broadcast %639 : f32 to vector<2x32xf32>
    %641 = arith.addf %638, %640 : vector<2x32xf32>
    %c115 = arith.constant 115 : index
    %642 = memref.load %arg4[%c115] : memref<128xf32, #tpu.memory_space<smem>>
    %643 = vector.broadcast %642 : f32 to vector<2x32xf32>
    %644 = arith.mulf %641, %643 : vector<2x32xf32>
    %645 = arith.addf %634, %644 : vector<2x32xf32>
    %c116 = arith.constant 116 : index
    %646 = memref.load %arg4[%c116] : memref<128xf32, #tpu.memory_space<smem>>
    %647 = vector.broadcast %646 : f32 to vector<2x32xf32>
    %648 = arith.addf %645, %647 : vector<2x32xf32>
    %649 = arith.addf %2, %648 : vector<2x32xf32>
    %cst_116 = arith.constant 0.000000e+00 : f32
    %650 = vector.broadcast %cst_116 : f32 to vector<2x32xf32>
    %651 = arith.maximumf %649, %650 : vector<2x32xf32>
    %c0_117 = arith.constant 0 : index
    %c0_118 = arith.constant 0 : index
    %652 = vector.load %arg5[%c0_117, %c0_118] : memref<2x32xf32, #tpu.memory_space<vmem>>, vector<2x32xf32>
    tpu.vector_store %arg5[%c0_117, %c0_118], %651 {strides = array<i32>} : memref<2x32xf32, #tpu.memory_space<vmem>>, vector<2x32xf32>,
    return
  }
  func.func @transform_0(%arg0: i32) -> (i32, i32) {
    %c0_i32 = arith.constant 0 : i32
    %c0_i32_0 = arith.constant 0 : i32
    return %arg0, %c0_i32 : i32, i32
  }
  func.func @transform_1(%arg0: i32) -> (i32, i32) {
    %c0_i32 = arith.constant 0 : i32
    %c0_i32_0 = arith.constant 0 : i32
    %c0_i32_1 = arith.constant 0 : i32
    return %c0_i32, %c0_i32_0 : i32, i32
  }
  func.func @transform_2(%arg0: i32) -> (i32, i32) {
    %c0_i32 = arith.constant 0 : i32
    %c0_i32_0 = arith.constant 0 : i32
    %c0_i32_1 = arith.constant 0 : i32
    return %c0_i32, %c0_i32_0 : i32, i32
  }
  func.func @transform_3(%arg0: i32) -> i32 {
    %c0_i32 = arith.constant 0 : i32
    %c0_i32_0 = arith.constant 0 : i32
    return %c0_i32 : i32
  }
  func.func @transform_4(%arg0: i32) -> (i32, i32) {
    %c0_i32 = arith.constant 0 : i32
    %c0_i32_0 = arith.constant 0 : i32
    return %arg0, %c0_i32 : i32, i32
  }
}

</mosaic_0001>

<llo_original>
// kernel: tpu_custom_call.1
$region0: #{tpu_custom_call.1}
  #allocation0 [shape = 'u32[]', space=smem, size = 0x4, offset = 0x4, fixed_abs, tag = 'smem constant byte address 0x4 - core index']
  #allocation1 [shape = 'u32[144,128]{1,0:T(1,128)}', space=vmem, size = 0x12000, scoped, tag = 'internal scratch']
  %s0 = inlined_call_operand.hbm [shape: f32[2,8], index: 0, kind: input, shape index: {}]
  %s1 = inlined_call_operand.hbm [shape: f32[2,8], index: 1, kind: input, shape index: {}]
  %s2 = inlined_call_operand.hbm [shape: f32[16,32], index: 2, kind: input, shape index: {}]
  %s3 = inlined_call_operand.hbm [shape: f32[128], index: 3, kind: input, shape index: {}]
  %s4 = inlined_call_operand.hbm [shape: f32[2,32], index: 4, kind: output, shape index: {}]
  %s5 = sld [smem:[#allocation0]]
  $region42: #{tpu_custom_call.1} parent=0
    _
  %s7 = ssub.s32 1, %s5
  %s8 = scalar_select 0, %s7, %s5
  $region1: #{tpu_custom_call.1} parent=0
    #allocation2 [shape = 'u8[1024]{0}', space=vmem, size = 0x400, scoped, tag = 'input window, operand 0, single buffered']
    #allocation3 [shape = 's32[1]{0}', space=sflag, size = 0x4, scoped, tag = 'scoped memory for tpu_custom_call.1']
    #allocation4 [shape = 's32[1]{0}', space=sflag, size = 0x4, scoped, tag = 'scoped memory for tpu_custom_call.1']
    #allocation5 [shape = 's32[1]{0}', space=sflag, size = 0x4, scoped, tag = 'scoped memory for tpu_custom_call.1']
    #allocation6 [shape = 'u8[1024]{0}', space=vmem, size = 0x400, scoped, tag = 'input window, operand 1, single buffered']
    #allocation7 [shape = 's32[1]{0}', space=sflag, size = 0x4, scoped, tag = 'scoped memory for tpu_custom_call.1']
    #allocation8 [shape = 'u8[8192]{0}', space=vmem, size = 0x2000, scoped, tag = 'input window, operand 2, single buffered']
    #allocation9 [shape = 'u8[512]{0}', space=smem, size = 0x200, scoped, tag = 'input window, operand 3, single buffered']
    #allocation10 [shape = 'u8[1024]{0}', space=vmem, size = 0x400, scoped, tag = 'output window, operand 0, single buffered']
    %9 = vsyncpa [#allocation3], 0
    %10 = vsyncpa [#allocation7], 0
    %11 = vsyncpa [#allocation5], 0
    %12 = vsyncpa [#allocation4], 0
    // Predicated region
    $region2: #{tpu_custom_call.1} parent=1 // pred_check
      _
    $region3: #{tpu_custom_call.1} parent=1 // pred_check_branch
      %14 = sbr.rel (0) target = $region5
    $region4: #{tpu_custom_call.1} parent=1 // pred_region
      %s16 = ssub.s32 32, 32
      %17 = vsyncadd [#allocation3], %s16
      %s19 = sshll.u32 [#allocation2], 4
      %s20 = int_to_ptr.vmem [resolvable:$true] %s19
      %22 = dma.hbm_to_vmem [thread:$0]  %s0, 32, %s20, [#allocation3]
    $region5: #{tpu_custom_call.1} parent=1 // pred_fallthru
      _
    // Predicated region
    $region6: #{tpu_custom_call.1} parent=1 // pred_check
      _
    $region7: #{tpu_custom_call.1} parent=1 // pred_check_branch
      %24 = sbr.rel (0) target = $region9
    $region8: #{tpu_custom_call.1} parent=1 // pred_region
      %s26 = ssub.s32 32, 32
      %27 = vsyncadd [#allocation7], %s26
      %s29 = sshll.u32 [#allocation6], 4
      %s30 = int_to_ptr.vmem [resolvable:$true] %s29
      %32 = dma.hbm_to_vmem [thread:$0]  %s1, 32, %s30, [#allocation7]
    $region9: #{tpu_custom_call.1} parent=1 // pred_fallthru
      _
    // Predicated region
    $region10: #{tpu_custom_call.1} parent=1 // pred_check
      _
    $region11: #{tpu_custom_call.1} parent=1 // pred_check_branch
      %34 = sbr.rel (0) target = $region13
    $region12: #{tpu_custom_call.1} parent=1 // pred_region
      %s36 = ssub.s32 256, 256
      %37 = vsyncadd [#allocation7], %s36
      %s38 = sshll.u32 [#allocation8], 4
      %s39 = int_to_ptr.vmem [resolvable:$true] %s38
      %44 = dma.hbm_to_vmem [thread:$0]  %s2, 256, %s39, [#allocation7], 128, 128, 8
    $region13: #{tpu_custom_call.1} parent=1 // pred_fallthru
      _
    // Predicated region
    $region14: #{tpu_custom_call.1} parent=1 // pred_check
      _
    $region15: #{tpu_custom_call.1} parent=1 // pred_check_branch
      %46 = sbr.rel (0) target = $region17
    $region16: #{tpu_custom_call.1} parent=1 // pred_region
      %s48 = ssub.s32 16, 16
      %49 = vsyncadd [#allocation5], %s48
      %52 = dma.hbm_to_smem %s3, 16, [#allocation9], [#allocation5]
    $region17: #{tpu_custom_call.1} parent=1 // pred_fallthru
      _
    // Predicated region
    $region18: #{tpu_custom_call.1} parent=1 // pred_check
      _
    $region19: #{tpu_custom_call.1} parent=1 // pred_check_branch
      %54 = sbr.rel (0) target = $region21
    $region20: #{tpu_custom_call.1} parent=1 // pred_region
      %55 = dma.done [#allocation3], 32
    $region21: #{tpu_custom_call.1} parent=1 // pred_fallthru
      _
    // Predicated region
    $region22: #{tpu_custom_call.1} parent=1 // pred_check
      _
    $region23: #{tpu_custom_call.1} parent=1 // pred_check_branch
      %57 = sbr.rel (0) target = $region25
    $region24: #{tpu_custom_call.1} parent=1 // pred_region
      %58 = dma.done [#allocation7], 32
    $region25: #{tpu_custom_call.1} parent=1 // pred_fallthru
      _
    // Predicated region
    $region26: #{tpu_custom_call.1} parent=1 // pred_check
      _
    $region27: #{tpu_custom_call.1} parent=1 // pred_check_branch
      %60 = sbr.rel (0) target = $region29
    $region28: #{tpu_custom_call.1} parent=1 // pred_region
      %61 = dma.done [#allocation7], 256
    $region29: #{tpu_custom_call.1} parent=1 // pred_fallthru
      _
    // Predicated region
    $region30: #{tpu_custom_call.1} parent=1 // pred_check
      _
    $region31: #{tpu_custom_call.1} parent=1 // pred_check_branch
      %63 = sbr.rel (0) target = $region33
    $region32: #{tpu_custom_call.1} parent=1 // pred_region
      %64 = dma.done [#allocation5], 16
    $region33: #{tpu_custom_call.1} parent=1 // pred_fallthru
      _
    %65 = sfence
    %v66 = vld [vmem:[#allocation2] sm:$0x3]
    %v67 = vld [vmem:[#allocation8] sm:$0xff]
    %vm68 = vcmask 64512
    %v70 = vsel %vm68, %v66, 0
    %72 = vmatprep.subr.mxu0 0.0
    %73 = vmatpush1.msra.mxu0 %v67
    %74 = vmatprep.subr.mxu0 0.0
    %75 = vmatpush1.msra.mxu0 0.0
    %76 = vmatprep.subr.mxu0 0.0
    %77 = vmatpush1.msra.mxu0 0.0
    %78 = vmatprep.subr.mxu0 0.0
    %79 = vmatpush1.msra.mxu0 0.0
    %80 = vmatprep.subr.mxu0 0.0
    %81 = vmatpush1.msra.mxu0 0.0
    %82 = vmatprep.subr.mxu0 0.0
    %83 = vmatpush1.msra.mxu0 0.0
    %84 = vmatprep.subr.mxu0 0.0
    %85 = vmatpush1.msra.mxu0 0.0
    %86 = vmatprep.subr.mxu0 0.0
    %87 = vmatpush1.msra.mxu0 0.0
    %88 = vmatprep.subr.mxu0 0.0
    %89 = vmatpush1.msra.mxu0 0.0
    %90 = vmatprep.subr.mxu0 0.0
    %91 = vmatpush1.msra.mxu0 0.0
    %92 = vmatprep.subr.mxu0 0.0
    %93 = vmatpush1.msra.mxu0 0.0
    %94 = vmatprep.subr.mxu0 0.0
    %95 = vmatpush1.msra.mxu0 0.0
    %96 = vmatprep.subr.mxu0 0.0
    %97 = vmatpush1.msra.mxu0 0.0
    %98 = vmatprep.subr.mxu0 0.0
    %99 = vmatpush1.msra.mxu0 0.0
    %100 = vmatprep.subr.mxu0 0.0
    %101 = vmatpush1.msra.mxu0 0.0
    %102 = vmatprep.subr.mxu0 0.0
    %103 = vmatpush1.msra.mxu0 0.0
    %104 = vmatprep.subr.mxu0 0.0
    %105 = vmatpush1.msra.mxu0 0.0
    %106 = vmatprep.subr.mxu0 0.0
    %107 = vmatpush1.msra.mxu0 0.0
    %108 = vmatprep.subr.mxu0 0.0
    %109 = vmatpush1.msra.mxu0 0.0
    %110 = vmatprep.subr.mxu0 0.0
    %111 = vmatpush1.msra.mxu0 0.0
    %112 = vmatprep.subr.mxu0 0.0
    %113 = vmatpush1.msra.mxu0 0.0
    %114 = vmatprep.subr.mxu0 0.0
    %115 = vmatpush1.msra.mxu0 0.0
    %116 = vmatprep.subr.mxu0 0.0
    %117 = vmatpush1.msra.mxu0 0.0
    %118 = vmatprep.subr.mxu0 0.0
    %119 = vmatpush1.msra.mxu0 0.0
    %120 = vmatprep.subr.mxu0 0.0
    %121 = vmatpush1.msra.mxu0 0.0
    %122 = vmatprep.subr.mxu0 0.0
    %123 = vmatpush1.msra.mxu0 0.0
    %124 = vmatprep.subr.mxu0 0.0
    %125 = vmatpush1.msra.mxu0 0.0
    %126 = vmatprep.subr.mxu0 0.0
    %127 = vmatpush1.msra.mxu0 0.0
    %128 = vmatprep.subr.mxu0 0.0
    %129 = vmatpush1.msra.mxu0 0.0
    %130 = vmatprep.subr.mxu0 0.0
    %131 = vmatpush1.msra.mxu0 0.0
    %132 = vmatprep.subr.mxu0 0.0
    %133 = vmatpush1.msra.mxu0 0.0
    %134 = vmatprep.subr.mxu0 0.0
    %135 = vmatpush1.msra.mxu0 0.0
    %136 = vmatprep.mubr.f32.mxu0 0.0
    %137 = vmatmul.mubr.f32.gmra.mrb[0].mxu0 %v70
    %v138 = vpop.f32.mrb[0].mxu0
    %v139 = vadd.f32 0.0, %v138
    %v140 = vpop.f32.mrb[0].mxu0
    %141 = vdwg.mxu0
    %v142 = vld [vmem:[#allocation6] sm:$0x3]
    %v143 = vld [vmem:[#allocation8 + $0x8] sm:$0xff]
    %v145 = vsel %vm68, %v142, 0
    %147 = vmatprep.subr.mxu0 0.0
    %148 = vmatpush1.msra.mxu0 %v143
    %149 = vmatprep.subr.mxu0 0.0
    %150 = vmatpush1.msra.mxu0 0.0
    %151 = vmatprep.subr.mxu0 0.0
    %152 = vmatpush1.msra.mxu0 0.0
    %153 = vmatprep.subr.mxu0 0.0
    %154 = vmatpush1.msra.mxu0 0.0
    %155 = vmatprep.subr.mxu0 0.0
    %156 = vmatpush1.msra.mxu0 0.0
    %157 = vmatprep.subr.mxu0 0.0
    %158 = vmatpush1.msra.mxu0 0.0
    %159 = vmatprep.subr.mxu0 0.0
    %160 = vmatpush1.msra.mxu0 0.0
    %161 = vmatprep.subr.mxu0 0.0
    %162 = vmatpush1.msra.mxu0 0.0
    %163 = vmatprep.subr.mxu0 0.0
    %164 = vmatpush1.msra.mxu0 0.0
    %165 = vmatprep.subr.mxu0 0.0
    %166 = vmatpush1.msra.mxu0 0.0
    %167 = vmatprep.subr.mxu0 0.0
    %168 = vmatpush1.msra.mxu0 0.0
    %169 = vmatprep.subr.mxu0 0.0
    %170 = vmatpush1.msra.mxu0 0.0
    %171 = vmatprep.subr.mxu0 0.0
    %172 = vmatpush1.msra.mxu0 0.0
    %173 = vmatprep.subr.mxu0 0.0
    %174 = vmatpush1.msra.mxu0 0.0
    %175 = vmatprep.subr.mxu0 0.0
    %176 = vmatpush1.msra.mxu0 0.0
    %177 = vmatprep.subr.mxu0 0.0
    %178 = vmatpush1.msra.mxu0 0.0
    %179 = vmatprep.subr.mxu0 0.0
    %180 = vmatpush1.msra.mxu0 0.0
    %181 = vmatprep.subr.mxu0 0.0
    %182 = vmatpush1.msra.mxu0 0.0
    %183 = vmatprep.subr.mxu0 0.0
    %184 = vmatpush1.msra.mxu0 0.0
    %185 = vmatprep.subr.mxu0 0.0
    %186 = vmatpush1.msra.mxu0 0.0
    %187 = vmatprep.subr.mxu0 0.0
    %188 = vmatpush1.msra.mxu0 0.0
    %189 = vmatprep.subr.mxu0 0.0
    %190 = vmatpush1.msra.mxu0 0.0
    %191 = vmatprep.subr.mxu0 0.0
    %192 = vmatpush1.msra.mxu0 0.0
    %193 = vmatprep.subr.mxu0 0.0
    %194 = vmatpush1.msra.mxu0 0.0
    %195 = vmatprep.subr.mxu0 0.0
    %196 = vmatpush1.msra.mxu0 0.0
    %197 = vmatprep.subr.mxu0 0.0
    %198 = vmatpush1.msra.mxu0 0.0
    %199 = vmatprep.subr.mxu0 0.0
    %200 = vmatpush1.msra.mxu0 0.0
    %201 = vmatprep.subr.mxu0 0.0
    %202 = vmatpush1.msra.mxu0 0.0
    %203 = vmatprep.subr.mxu0 0.0
    %204 = vmatpush1.msra.mxu0 0.0
    %205 = vmatprep.subr.mxu0 0.0
    %206 = vmatpush1.msra.mxu0 0.0
    %207 = vmatprep.subr.mxu0 0.0
    %208 = vmatpush1.msra.mxu0 0.0
    %209 = vmatprep.subr.mxu0 0.0
    %210 = vmatpush1.msra.mxu0 0.0
    %211 = vmatprep.mubr.f32.mxu0 0.0
    %212 = vmatmul.mubr.f32.gmra.mrb[0].mxu0 %v145
    %v213 = vpop.f32.mrb[0].mxu0
    %v214 = vadd.f32 0.0, %v213
    %v215 = vpop.f32.mrb[0].mxu0
    %216 = vdwg.mxu0
    %s217 = sld [smem:[#allocation9 + $0x18]]
    %s218 = sld [smem:[#allocation9]]
    %s219 = smul.f32 %s217, %s218
    %s220 = sld [smem:[#allocation9 + $0x4]]
    %s221 = smul.f32 %s217, %s220
    %s222 = sld [smem:[#allocation9 + $0x19]]
    %s223 = sld [smem:[#allocation9 + $0x1]]
    %s224 = smul.f32 %s222, %s223
    %s225 = sadd.f32 %s219, %s224
    %s226 = sld [smem:[#allocation9 + $0x5]]
    %s227 = smul.f32 %s222, %s226
    %s228 = sadd.f32 %s221, %s227
    %s229 = sld [smem:[#allocation9 + $0x1a]]
    %s230 = sld [smem:[#allocation9 + $0x2]]
    %s231 = smul.f32 %s229, %s230
    %s232 = sadd.f32 %s225, %s231
    %s233 = sld [smem:[#allocation9 + $0x6]]
    %s234 = smul.f32 %s229, %s233
    %s235 = sadd.f32 %s228, %s234
    %s236 = sld [smem:[#allocation9 + $0x1b]]
    %s237 = sld [smem:[#allocation9 + $0x3]]
    %s238 = smul.f32 %s236, %s237
    %s239 = sadd.f32 %s232, %s238
    %s240 = sld [smem:[#allocation9 + $0x7]]
    %s241 = smul.f32 %s236, %s240
    %s242 = sadd.f32 %s235, %s241
    %s243 = sld [smem:[#allocation9 + $0x48]]
    %s244 = sadd.f32 %s242, %s243
    %s245 = sld [smem:[#allocation9 + $0x1c]]
    %s246 = smul.f32 %s245, %s218
    %s247 = smul.f32 %s245, %s220
    %s248 = sld [smem:[#allocation9 + $0x1d]]
    %s249 = smul.f32 %s248, %s223
    %s250 = sadd.f32 %s246, %s249
    %s251 = smul.f32 %s248, %s226
    %s252 = sadd.f32 %s247, %s251
    %s253 = sld [smem:[#allocation9 + $0x1e]]
    %s254 = smul.f32 %s253, %s230
    %s255 = sadd.f32 %s250, %s254
    %s256 = smul.f32 %s253, %s233
    %s257 = sadd.f32 %s252, %s256
    %s258 = sld [smem:[#allocation9 + $0x1f]]
    %s259 = smul.f32 %s258, %s237
    %s260 = sadd.f32 %s255, %s259
    %s261 = smul.f32 %s258, %s240
    %s262 = sadd.f32 %s257, %s261
    %s263 = sld [smem:[#allocation9 + $0x49]]
    %s264 = sadd.f32 %s262, %s263
    %s265 = sld [smem:[#allocation9 + $0x20]]
    %s266 = smul.f32 %s265, %s218
    %s267 = smul.f32 %s265, %s220
    %s268 = sld [smem:[#allocation9 + $0x21]]
    %s269 = smul.f32 %s268, %s223
    %s270 = sadd.f32 %s266, %s269
    %s271 = smul.f32 %s268, %s226
    %s272 = sadd.f32 %s267, %s271
    %s273 = sld [smem:[#allocation9 + $0x22]]
    %s274 = smul.f32 %s273, %s230
    %s275 = sadd.f32 %s270, %s274
    %s276 = smul.f32 %s273, %s233
    %s277 = sadd.f32 %s272, %s276
    %s278 = sld [smem:[#allocation9 + $0x23]]
    %s279 = smul.f32 %s278, %s237
    %s280 = sadd.f32 %s275, %s279
    %s281 = smul.f32 %s278, %s240
    %s282 = sadd.f32 %s277, %s281
    %s283 = sld [smem:[#allocation9 + $0x4a]]
    %s284 = sadd.f32 %s282, %s283
    %s285 = sld [smem:[#allocation9 + $0x24]]
    %s286 = smul.f32 %s285, %s218
    %s287 = smul.f32 %s285, %s220
    %s288 = sld [smem:[#allocation9 + $0x25]]
    %s289 = smul.f32 %s288, %s223
    %s290 = sadd.f32 %s286, %s289
    %s291 = smul.f32 %s288, %s226
    %s292 = sadd.f32 %s287, %s291
    %s293 = sld [smem:[#allocation9 + $0x26]]
    %s294 = smul.f32 %s293, %s230
    %s295 = sadd.f32 %s290, %s294
    %s296 = smul.f32 %s293, %s233
    %s297 = sadd.f32 %s292, %s296
    %s298 = sld [smem:[#allocation9 + $0x27]]
    %s299 = smul.f32 %s298, %s237
    %s300 = sadd.f32 %s295, %s299
    %s301 = smul.f32 %s298, %s240
    %s302 = sadd.f32 %s297, %s301
    %s303 = sld [smem:[#allocation9 + $0x4b]]
    %s304 = sadd.f32 %s302, %s303
    %s305 = sld [smem:[#allocation9 + $0x28]]
    %s306 = sld [smem:[#allocation9 + $0x8]]
    %s307 = smul.f32 %s305, %s306
    %s308 = sld [smem:[#allocation9 + $0xc]]
    %s309 = smul.f32 %s305, %s308
    %s310 = sld [smem:[#allocation9 + $0x29]]
    %s311 = sld [smem:[#allocation9 + $0x9]]
    %s312 = smul.f32 %s310, %s311
    %s313 = sadd.f32 %s307, %s312
    %s314 = sld [smem:[#allocation9 + $0xd]]
    %s315 = smul.f32 %s310, %s314
    %s316 = sadd.f32 %s309, %s315
    %s317 = sld [smem:[#allocation9 + $0x2a]]
    %s318 = sld [smem:[#allocation9 + $0xa]]
    %s319 = smul.f32 %s317, %s318
    %s320 = sadd.f32 %s313, %s319
    %s321 = sld [smem:[#allocation9 + $0xe]]
    %s322 = smul.f32 %s317, %s321
    %s323 = sadd.f32 %s316, %s322
    %s324 = sld [smem:[#allocation9 + $0x2b]]
    %s325 = sld [smem:[#allocation9 + $0xb]]
    %s326 = smul.f32 %s324, %s325
    %s327 = sadd.f32 %s320, %s326
    %s328 = sld [smem:[#allocation9 + $0xf]]
    %s329 = smul.f32 %s324, %s328
    %s330 = sadd.f32 %s323, %s329
    %s331 = sld [smem:[#allocation9 + $0x4c]]
    %s332 = sadd.f32 %s330, %s331
    %s333 = sld [smem:[#allocation9 + $0x2c]]
    %s334 = smul.f32 %s333, %s306
    %s335 = smul.f32 %s333, %s308
    %s336 = sld [smem:[#allocation9 + $0x2d]]
    %s337 = smul.f32 %s336, %s311
    %s338 = sadd.f32 %s334, %s337
    %s339 = smul.f32 %s336, %s314
    %s340 = sadd.f32 %s335, %s339
    %s341 = sld [smem:[#allocation9 + $0x2e]]
    %s342 = smul.f32 %s341, %s318
    %s343 = sadd.f32 %s338, %s342
    %s344 = smul.f32 %s341, %s321
    %s345 = sadd.f32 %s340, %s344
    %s346 = sld [smem:[#allocation9 + $0x2f]]
    %s347 = smul.f32 %s346, %s325
    %s348 = sadd.f32 %s343, %s347
    %s349 = smul.f32 %s346, %s328
    %s350 = sadd.f32 %s345, %s349
    %s351 = sld [smem:[#allocation9 + $0x4d]]
    %s352 = sadd.f32 %s350, %s351
    %s353 = sld [smem:[#allocation9 + $0x30]]
    %s354 = smul.f32 %s353, %s306
    %s355 = smul.f32 %s353, %s308
    %s356 = sld [smem:[#allocation9 + $0x31]]
    %s357 = smul.f32 %s356, %s311
    %s358 = sadd.f32 %s354, %s357
    %s359 = smul.f32 %s356, %s314
    %s360 = sadd.f32 %s355, %s359
    %s361 = sld [smem:[#allocation9 + $0x32]]
    %s362 = smul.f32 %s361, %s318
    %s363 = sadd.f32 %s358, %s362
    %s364 = smul.f32 %s361, %s321
    %s365 = sadd.f32 %s360, %s364
    %s366 = sld [smem:[#allocation9 + $0x33]]
    %s367 = smul.f32 %s366, %s325
    %s368 = sadd.f32 %s363, %s367
    %s369 = smul.f32 %s366, %s328
    %s370 = sadd.f32 %s365, %s369
    %s371 = sld [smem:[#allocation9 + $0x4e]]
    %s372 = sadd.f32 %s370, %s371
    %s373 = sld [smem:[#allocation9 + $0x34]]
    %s374 = smul.f32 %s373, %s306
    %s375 = smul.f32 %s373, %s308
    %s376 = sld [smem:[#allocation9 + $0x35]]
    %s377 = smul.f32 %s376, %s311
    %s378 = sadd.f32 %s374, %s377
    %s379 = smul.f32 %s376, %s314
    %s380 = sadd.f32 %s375, %s379
    %s381 = sld [smem:[#allocation9 + $0x36]]
    %s382 = smul.f32 %s381, %s318
    %s383 = sadd.f32 %s378, %s382
    %s384 = smul.f32 %s381, %s321
    %s385 = sadd.f32 %s380, %s384
    %s386 = sld [smem:[#allocation9 + $0x37]]
    %s387 = smul.f32 %s386, %s325
    %s388 = sadd.f32 %s383, %s387
    %s389 = smul.f32 %s386, %s328
    %s390 = sadd.f32 %s385, %s389
    %s391 = sld [smem:[#allocation9 + $0x4f]]
    %s392 = sadd.f32 %s390, %s391
    %s393 = sld [smem:[#allocation9 + $0x38]]
    %s394 = sld [smem:[#allocation9 + $0x10]]
    %s395 = smul.f32 %s393, %s394
    %s396 = sld [smem:[#allocation9 + $0x14]]
    %s397 = smul.f32 %s393, %s396
    %s398 = sld [smem:[#allocation9 + $0x39]]
    %s399 = sld [smem:[#allocation9 + $0x11]]
    %s400 = smul.f32 %s398, %s399
    %s401 = sadd.f32 %s395, %s400
    %s402 = sld [smem:[#allocation9 + $0x15]]
    %s403 = smul.f32 %s398, %s402
    %s404 = sadd.f32 %s397, %s403
    %s405 = sld [smem:[#allocation9 + $0x3a]]
    %s406 = sld [smem:[#allocation9 + $0x12]]
    %s407 = smul.f32 %s405, %s406
    %s408 = sadd.f32 %s401, %s407
    %s409 = sld [smem:[#allocation9 + $0x16]]
    %s410 = smul.f32 %s405, %s409
    %s411 = sadd.f32 %s404, %s410
    %s412 = sld [smem:[#allocation9 + $0x3b]]
    %s413 = sld [smem:[#allocation9 + $0x13]]
    %s414 = smul.f32 %s412, %s413
    %s415 = sadd.f32 %s408, %s414
    %s416 = sld [smem:[#allocation9 + $0x17]]
    %s417 = smul.f32 %s412, %s416
    %s418 = sadd.f32 %s411, %s417
    %s419 = sld [smem:[#allocation9 + $0x50]]
    %s420 = sadd.f32 %s418, %s419
    %s421 = sld [smem:[#allocation9 + $0x3c]]
    %s422 = smul.f32 %s421, %s394
    %s423 = smul.f32 %s421, %s396
    %s424 = sld [smem:[#allocation9 + $0x3d]]
    %s425 = smul.f32 %s424, %s399
    %s426 = sadd.f32 %s422, %s425
    %s427 = smul.f32 %s424, %s402
    %s428 = sadd.f32 %s423, %s427
    %s429 = sld [smem:[#allocation9 + $0x3e]]
    %s430 = smul.f32 %s429, %s406
    %s431 = sadd.f32 %s426, %s430
    %s432 = smul.f32 %s429, %s409
    %s433 = sadd.f32 %s428, %s432
    %s434 = sld [smem:[#allocation9 + $0x3f]]
    %s435 = smul.f32 %s434, %s413
    %s436 = sadd.f32 %s431, %s435
    %s437 = smul.f32 %s434, %s416
    %s438 = sadd.f32 %s433, %s437
    %s439 = sld [smem:[#allocation9 + $0x51]]
    %s440 = sadd.f32 %s438, %s439
    %s441 = sld [smem:[#allocation9 + $0x40]]
    %s442 = smul.f32 %s441, %s394
    %s443 = smul.f32 %s441, %s396
    %s444 = sld [smem:[#allocation9 + $0x41]]
    %s445 = smul.f32 %s444, %s399
    %s446 = sadd.f32 %s442, %s445
    %s447 = smul.f32 %s444, %s402
    %s448 = sadd.f32 %s443, %s447
    %s449 = sld [smem:[#allocation9 + $0x42]]
    %s450 = smul.f32 %s449, %s406
    %s451 = sadd.f32 %s446, %s450
    %s452 = smul.f32 %s449, %s409
    %s453 = sadd.f32 %s448, %s452
    %s454 = sld [smem:[#allocation9 + $0x43]]
    %s455 = smul.f32 %s454, %s413
    %s456 = sadd.f32 %s451, %s455
    %s457 = smul.f32 %s454, %s416
    %s458 = sadd.f32 %s453, %s457
    %s459 = sld [smem:[#allocation9 + $0x52]]
    %s460 = sadd.f32 %s458, %s459
    %s461 = sld [smem:[#allocation9 + $0x44]]
    %s462 = smul.f32 %s461, %s394
    %s463 = smul.f32 %s461, %s396
    %s464 = sld [smem:[#allocation9 + $0x45]]
    %s465 = smul.f32 %s464, %s399
    %s466 = sadd.f32 %s462, %s465
    %s467 = smul.f32 %s464, %s402
    %s468 = sadd.f32 %s463, %s467
    %s469 = sld [smem:[#allocation9 + $0x46]]
    %s470 = smul.f32 %s469, %s406
    %s471 = sadd.f32 %s466, %s470
    %s472 = smul.f32 %s469, %s409
    %s473 = sadd.f32 %s468, %s472
    %s474 = sld [smem:[#allocation9 + $0x47]]
    %s475 = smul.f32 %s474, %s413
    %s476 = sadd.f32 %s471, %s475
    %s477 = smul.f32 %s474, %s416
    %s478 = sadd.f32 %s473, %s477
    %s479 = sld [smem:[#allocation9 + $0x53]]
    %s480 = sadd.f32 %s478, %s479
    %v481 = vstv %s239
    %v482 = vmul.f32 %v139, %v481
    %v483 = vstv %s244
    %v484 = vadd.f32 %v482, %v483
    %v485 = vstv %s260
    %v486 = vmul.f32 %v139, %v485
    %v487 = vstv %s264
    %v488 = vadd.f32 %v486, %v487
    %v489 = vstv %s280
    %v490 = vmul.f32 %v139, %v489
    %v491 = vstv %s284
    %v492 = vadd.f32 %v490, %v491
    %v493 = vstv %s300
    %v494 = vmul.f32 %v139, %v493
    %v495 = vstv %s304
    %v496 = vadd.f32 %v494, %v495
    %v497 = vstv %s327
    %v498 = vmul.f32 %v214, %v497
    %v499 = vstv %s332
    %v500 = vadd.f32 %v498, %v499
    %v501 = vstv %s348
    %v502 = vmul.f32 %v214, %v501
    %v503 = vstv %s352
    %v504 = vadd.f32 %v502, %v503
    %v505 = vstv %s368
    %v506 = vmul.f32 %v214, %v505
    %v507 = vstv %s372
    %v508 = vadd.f32 %v506, %v507
    %v509 = vstv %s388
    %v510 = vmul.f32 %v214, %v509
    %v511 = vstv %s392
    %v512 = vadd.f32 %v510, %v511
    %v513 = vstv %s415
    %v514 = vmul.f32 %v214, %v513
    %v515 = vstv %s420
    %v516 = vadd.f32 %v514, %v515
    %v517 = vstv %s436
    %v518 = vmul.f32 %v214, %v517
    %v519 = vstv %s440
    %v520 = vadd.f32 %v518, %v519
    %v521 = vstv %s456
    %v522 = vmul.f32 %v214, %v521
    %v523 = vstv %s460
    %v524 = vadd.f32 %v522, %v523
    %v525 = vstv %s476
    %v526 = vmul.f32 %v214, %v525
    %v527 = vstv %s480
    %v528 = vadd.f32 %v526, %v527
    %vm529 = vcmask 254976
    %v530 = vsel %vm529, %v500, -inf
    %v531 = vrot.slane %v530, 4
    %v532 = vmax.f32 %v530, %v531
    %v533 = vrot.slane %v532, 2
    %v534 = vmax.f32 %v532, %v533
    %v535 = vrot.slane %v534, 1
    %v536 = vmax.f32 %v534, %v535
    %v537 = vsel %vm529, %v500, inf
    %v538 = vrot.slane %v537, 4
    %v539 = vmin.f32 %v537, %v538
    %v540 = vrot.slane %v539, 2
    %v541 = vmin.f32 %v539, %v540
    %v542 = vrot.slane %v541, 1
    %v543 = vmin.f32 %v541, %v542
    %vm544 = vcmp.ge.f32.partialorder %v484, 0.0
    %v545 = vmul.f32 %v484, %v536
    %v546 = vmul.f32 %v484, %v543
    %v547 = vsel %vm544, %v545, %v546
    %v550 = vunpack.c.l.s4 1966171168
    %v551 = vunpack.c.0.s8 %v550
    %v552 = vlaneseq
    %v553 = vshrl.u32 %v552, 7
    %v554 = vsub.s32 %v551, %v553
    %v555 = vrot.slane %v484, %v554
    %v556 = vcombine.high %v555, %v555
    %v558 = vunpack.c.l.s4 1966171168
    %v559 = vunpack.c.0.s8 %v558
    %v560 = vlaneseq
    %v561 = vshrl.u32 %v560, 7
    %v562 = vsub.s32 %v559, %v561
    %v563 = vrot.slane %v555, %v562
    %v565 = vunpack.c.l.s4 1966171168
    %v566 = vunpack.c.0.s8 %v565
    %v567 = vlaneseq
    %v568 = vshrl.u32 %v567, 7
    %v569 = vsub.s32 %v566, %v568
    %v570 = vrot.slane %v556, %v569
    %v571 = vlaneseq
    %v572 = vshrl.u32 %v571, 7
    %v573 = vsub.s32 0, %v572
    %v574 = vrot.slane %v563, %v573
    %v575 = vlaneseq
    %v576 = vshrl.u32 %v575, 7
    %v577 = vsub.s32 0, %v576
    %v578 = vrot.slane %v570, %v577
    %v581 = vmul.f32 %v574, %v500
    %v582 = vmul.f32 %v578, %v500
    %v585 = vunpack.c.l.s4 1966171168
    %v586 = vunpack.c.0.s8 %v585
    %v587 = vlaneseq
    %v588 = vshrl.u32 %v587, 7
    %v589 = vsub.s32 %v586, %v588
    %v590 = vrot.slane %v547, %v589
    %v591 = vcombine.high %v590, %v590
    %v593 = vunpack.c.l.s4 1966171168
    %v594 = vunpack.c.0.s8 %v593
    %v595 = vlaneseq
    %v596 = vshrl.u32 %v595, 7
    %v597 = vsub.s32 %v594, %v596
    %v598 = vrot.slane %v590, %v597
    %v600 = vunpack.c.l.s4 1966171168
    %v601 = vunpack.c.0.s8 %v600
    %v602 = vlaneseq
    %v603 = vshrl.u32 %v602, 7
    %v604 = vsub.s32 %v601, %v603
    %v605 = vrot.slane %v591, %v604
    %v606 = vlaneseq
    %v607 = vshrl.u32 %v606, 7
    %v608 = vsub.s32 0, %v607
    %v609 = vrot.slane %v598, %v608
    %v610 = vlaneseq
    %v611 = vshrl.u32 %v610, 7
    %v612 = vsub.s32 0, %v611
    %v613 = vrot.slane %v605, %v612
    %v616 = vsub.f32 %v581, %v609
    %v617 = vsub.f32 %v582, %v613
    %v618 = vmul.f32 %v616, 1.442695
    %v619 = vpow.pop %v618
    %v620 = vmul.f32 %v617, 1.442695
    %v621 = vpow.pop %v620
    %v622 = vmul.f32 %v619, %v516
    %v623 = vmul.f32 %v621, %v516
    %v624 = vsel %vm529, %v622, 0.0
    %v625 = vrot.slane %v624, 4
    %v626 = vadd.f32 %v624, %v625
    %v627 = vrot.slane %v626, 2
    %v628 = vadd.f32 %v626, %v627
    %v629 = vrot.slane %v628, 1
    %v630 = vadd.f32 %v628, %v629
    %v631 = vsel %vm529, %v623, 0.0
    %v632 = vrot.slane %v631, 4
    %v633 = vadd.f32 %v631, %v632
    %v634 = vrot.slane %v633, 2
    %v635 = vadd.f32 %v633, %v634
    %v636 = vrot.slane %v635, 1
    %v637 = vadd.f32 %v635, %v636
    %v638 = vsel %vm529, %v619, 0.0
    %v639 = vrot.slane %v638, 4
    %v640 = vadd.f32 %v638, %v639
    %v641 = vrot.slane %v640, 2
    %v642 = vadd.f32 %v640, %v641
    %v643 = vrot.slane %v642, 1
    %v644 = vadd.f32 %v642, %v643
    %v645 = vsel %vm529, %v621, 0.0
    %v646 = vrot.slane %v645, 4
    %v647 = vadd.f32 %v645, %v646
    %v648 = vrot.slane %v647, 2
    %v649 = vadd.f32 %v647, %v648
    %v650 = vrot.slane %v649, 1
    %v651 = vadd.f32 %v649, %v650
    %v652 = vrcp.pop %v644
    %v653 = vrcp.pop %v651
    %v654 = vmul.f32 %v630, %v652
    %v655 = vmul.f32 %v637, %v653
    %v656 = vsel %vm529, %v504, -inf
    %v657 = vrot.slane %v656, 4
    %v658 = vmax.f32 %v656, %v657
    %v659 = vrot.slane %v658, 2
    %v660 = vmax.f32 %v658, %v659
    %v661 = vrot.slane %v660, 1
    %v662 = vmax.f32 %v660, %v661
    %v663 = vsel %vm529, %v504, inf
    %v664 = vrot.slane %v663, 4
    %v665 = vmin.f32 %v663, %v664
    %v666 = vrot.slane %v665, 2
    %v667 = vmin.f32 %v665, %v666
    %v668 = vrot.slane %v667, 1
    %v669 = vmin.f32 %v667, %v668
    %vm670 = vcmp.ge.f32.partialorder %v488, 0.0
    %v671 = vmul.f32 %v488, %v662
    %v672 = vmul.f32 %v488, %v669
    %v673 = vsel %vm670, %v671, %v672
    %v676 = vunpack.c.l.s4 1966171168
    %v677 = vunpack.c.0.s8 %v676
    %v678 = vlaneseq
    %v679 = vshrl.u32 %v678, 7
    %v680 = vsub.s32 %v677, %v679
    %v681 = vrot.slane %v488, %v680
    %v682 = vcombine.high %v681, %v681
    %v684 = vunpack.c.l.s4 1966171168
    %v685 = vunpack.c.0.s8 %v684
    %v686 = vlaneseq
    %v687 = vshrl.u32 %v686, 7
    %v688 = vsub.s32 %v685, %v687
    %v689 = vrot.slane %v681, %v688
    %v691 = vunpack.c.l.s4 1966171168
    %v692 = vunpack.c.0.s8 %v691
    %v693 = vlaneseq
    %v694 = vshrl.u32 %v693, 7
    %v695 = vsub.s32 %v692, %v694
    %v696 = vrot.slane %v682, %v695
    %v697 = vlaneseq
    %v698 = vshrl.u32 %v697, 7
    %v699 = vsub.s32 0, %v698
    %v700 = vrot.slane %v689, %v699
    %v701 = vlaneseq
    %v702 = vshrl.u32 %v701, 7
    %v703 = vsub.s32 0, %v702
    %v704 = vrot.slane %v696, %v703
    %v707 = vmul.f32 %v700, %v504
    %v708 = vmul.f32 %v704, %v504
    %v711 = vunpack.c.l.s4 1966171168
    %v712 = vunpack.c.0.s8 %v711
    %v713 = vlaneseq
    %v714 = vshrl.u32 %v713, 7
    %v715 = vsub.s32 %v712, %v714
    %v716 = vrot.slane %v673, %v715
    %v717 = vcombine.high %v716, %v716
    %v719 = vunpack.c.l.s4 1966171168
    %v720 = vunpack.c.0.s8 %v719
    %v721 = vlaneseq
    %v722 = vshrl.u32 %v721, 7
    %v723 = vsub.s32 %v720, %v722
    %v724 = vrot.slane %v716, %v723
    %v726 = vunpack.c.l.s4 1966171168
    %v727 = vunpack.c.0.s8 %v726
    %v728 = vlaneseq
    %v729 = vshrl.u32 %v728, 7
    %v730 = vsub.s32 %v727, %v729
    %v731 = vrot.slane %v717, %v730
    %v732 = vlaneseq
    %v733 = vshrl.u32 %v732, 7
    %v734 = vsub.s32 0, %v733
    %v735 = vrot.slane %v724, %v734
    %v736 = vlaneseq
    %v737 = vshrl.u32 %v736, 7
    %v738 = vsub.s32 0, %v737
    %v739 = vrot.slane %v731, %v738
    %v742 = vsub.f32 %v707, %v735
    %v743 = vsub.f32 %v708, %v739
    %v744 = vmul.f32 %v742, 1.442695
    %v745 = vpow.pop %v744
    %v746 = vmul.f32 %v743, 1.442695
    %v747 = vpow.pop %v746
    %v748 = vmul.f32 %v745, %v520
    %v749 = vmul.f32 %v747, %v520
    %v750 = vsel %vm529, %v748, 0.0
    %v751 = vrot.slane %v750, 4
    %v752 = vadd.f32 %v750, %v751
    %v753 = vrot.slane %v752, 2
    %v754 = vadd.f32 %v752, %v753
    %v755 = vrot.slane %v754, 1
    %v756 = vadd.f32 %v754, %v755
    %v757 = vsel %vm529, %v749, 0.0
    %v758 = vrot.slane %v757, 4
    %v759 = vadd.f32 %v757, %v758
    %v760 = vrot.slane %v759, 2
    %v761 = vadd.f32 %v759, %v760
    %v762 = vrot.slane %v761, 1
    %v763 = vadd.f32 %v761, %v762
    %v764 = vsel %vm529, %v745, 0.0
    %v765 = vrot.slane %v764, 4
    %v766 = vadd.f32 %v764, %v765
    %v767 = vrot.slane %v766, 2
    %v768 = vadd.f32 %v766, %v767
    %v769 = vrot.slane %v768, 1
    %v770 = vadd.f32 %v768, %v769
    %v771 = vsel %vm529, %v747, 0.0
    %v772 = vrot.slane %v771, 4
    %v773 = vadd.f32 %v771, %v772
    %v774 = vrot.slane %v773, 2
    %v775 = vadd.f32 %v773, %v774
    %v776 = vrot.slane %v775, 1
    %v777 = vadd.f32 %v775, %v776
    %v778 = vrcp.pop %v770
    %v779 = vrcp.pop %v777
    %v780 = vmul.f32 %v756, %v778
    %v781 = vmul.f32 %v763, %v779
    %v782 = vsel %vm529, %v508, -inf
    %v783 = vrot.slane %v782, 4
    %v784 = vmax.f32 %v782, %v783
    %v785 = vrot.slane %v784, 2
    %v786 = vmax.f32 %v784, %v785
    %v787 = vrot.slane %v786, 1
    %v788 = vmax.f32 %v786, %v787
    %v789 = vsel %vm529, %v508, inf
    %v790 = vrot.slane %v789, 4
    %v791 = vmin.f32 %v789, %v790
    %v792 = vrot.slane %v791, 2
    %v793 = vmin.f32 %v791, %v792
    %v794 = vrot.slane %v793, 1
    %v795 = vmin.f32 %v793, %v794
    %vm796 = vcmp.ge.f32.partialorder %v492, 0.0
    %v797 = vmul.f32 %v492, %v788
    %v798 = vmul.f32 %v492, %v795
    %v799 = vsel %vm796, %v797, %v798
    %v802 = vunpack.c.l.s4 1966171168
    %v803 = vunpack.c.0.s8 %v802
    %v804 = vlaneseq
    %v805 = vshrl.u32 %v804, 7
    %v806 = vsub.s32 %v803, %v805
    %v807 = vrot.slane %v492, %v806
    %v808 = vcombine.high %v807, %v807
    %v810 = vunpack.c.l.s4 1966171168
    %v811 = vunpack.c.0.s8 %v810
    %v812 = vlaneseq
    %v813 = vshrl.u32 %v812, 7
    %v814 = vsub.s32 %v811, %v813
    %v815 = vrot.slane %v807, %v814
    %v817 = vunpack.c.l.s4 1966171168
    %v818 = vunpack.c.0.s8 %v817
    %v819 = vlaneseq
    %v820 = vshrl.u32 %v819, 7
    %v821 = vsub.s32 %v818, %v820
    %v822 = vrot.slane %v808, %v821
    %v823 = vlaneseq
    %v824 = vshrl.u32 %v823, 7
    %v825 = vsub.s32 0, %v824
    %v826 = vrot.slane %v815, %v825
    %v827 = vlaneseq
    %v828 = vshrl.u32 %v827, 7
    %v829 = vsub.s32 0, %v828
    %v830 = vrot.slane %v822, %v829
    %v833 = vmul.f32 %v826, %v508
    %v834 = vmul.f32 %v830, %v508
    %v837 = vunpack.c.l.s4 1966171168
    %v838 = vunpack.c.0.s8 %v837
    %v839 = vlaneseq
    %v840 = vshrl.u32 %v839, 7
    %v841 = vsub.s32 %v838, %v840
    %v842 = vrot.slane %v799, %v841
    %v843 = vcombine.high %v842, %v842
    %v845 = vunpack.c.l.s4 1966171168
    %v846 = vunpack.c.0.s8 %v845
    %v847 = vlaneseq
    %v848 = vshrl.u32 %v847, 7
    %v849 = vsub.s32 %v846, %v848
    %v850 = vrot.slane %v842, %v849
    %v852 = vunpack.c.l.s4 1966171168
    %v853 = vunpack.c.0.s8 %v852
    %v854 = vlaneseq
    %v855 = vshrl.u32 %v854, 7
    %v856 = vsub.s32 %v853, %v855
    %v857 = vrot.slane %v843, %v856
    %v858 = vlaneseq
    %v859 = vshrl.u32 %v858, 7
    %v860 = vsub.s32 0, %v859
    %v861 = vrot.slane %v850, %v860
    %v862 = vlaneseq
    %v863 = vshrl.u32 %v862, 7
    %v864 = vsub.s32 0, %v863
    %v865 = vrot.slane %v857, %v864
    %v868 = vsub.f32 %v833, %v861
    %v869 = vsub.f32 %v834, %v865
    %v870 = vmul.f32 %v868, 1.442695
    %v871 = vpow.pop %v870
    %v872 = vmul.f32 %v869, 1.442695
    %v873 = vpow.pop %v872
    %v874 = vmul.f32 %v871, %v524
    %v875 = vmul.f32 %v873, %v524
    %v876 = vsel %vm529, %v874, 0.0
    %v877 = vrot.slane %v876, 4
    %v878 = vadd.f32 %v876, %v877
    %v879 = vrot.slane %v878, 2
    %v880 = vadd.f32 %v878, %v879
    %v881 = vrot.slane %v880, 1
    %v882 = vadd.f32 %v880, %v881
    %v883 = vsel %vm529, %v875, 0.0
    %v884 = vrot.slane %v883, 4
    %v885 = vadd.f32 %v883, %v884
    %v886 = vrot.slane %v885, 2
    %v887 = vadd.f32 %v885, %v886
    %v888 = vrot.slane %v887, 1
    %v889 = vadd.f32 %v887, %v888
    %v890 = vsel %vm529, %v871, 0.0
    %v891 = vrot.slane %v890, 4
    %v892 = vadd.f32 %v890, %v891
    %v893 = vrot.slane %v892, 2
    %v894 = vadd.f32 %v892, %v893
    %v895 = vrot.slane %v894, 1
    %v896 = vadd.f32 %v894, %v895
    %v897 = vsel %vm529, %v873, 0.0
    %v898 = vrot.slane %v897, 4
    %v899 = vadd.f32 %v897, %v898
    %v900 = vrot.slane %v899, 2
    %v901 = vadd.f32 %v899, %v900
    %v902 = vrot.slane %v901, 1
    %v903 = vadd.f32 %v901, %v902
    %v904 = vrcp.pop %v896
    %v905 = vrcp.pop %v903
    %v906 = vmul.f32 %v882, %v904
    %v907 = vmul.f32 %v889, %v905
    %v908 = vsel %vm529, %v512, -inf
    %v909 = vrot.slane %v908, 4
    %v910 = vmax.f32 %v908, %v909
    %v911 = vrot.slane %v910, 2
    %v912 = vmax.f32 %v910, %v911
    %v913 = vrot.slane %v912, 1
    %v914 = vmax.f32 %v912, %v913
    %v915 = vsel %vm529, %v512, inf
    %v916 = vrot.slane %v915, 4
    %v917 = vmin.f32 %v915, %v916
    %v918 = vrot.slane %v917, 2
    %v919 = vmin.f32 %v917, %v918
    %v920 = vrot.slane %v919, 1
    %v921 = vmin.f32 %v919, %v920
    %vm922 = vcmp.ge.f32.partialorder %v496, 0.0
    %v923 = vmul.f32 %v496, %v914
    %v924 = vmul.f32 %v496, %v921
    %v925 = vsel %vm922, %v923, %v924
    %v928 = vunpack.c.l.s4 1966171168
    %v929 = vunpack.c.0.s8 %v928
    %v930 = vlaneseq
    %v931 = vshrl.u32 %v930, 7
    %v932 = vsub.s32 %v929, %v931
    %v933 = vrot.slane %v496, %v932
    %v934 = vcombine.high %v933, %v933
    %v936 = vunpack.c.l.s4 1966171168
    %v937 = vunpack.c.0.s8 %v936
    %v938 = vlaneseq
    %v939 = vshrl.u32 %v938, 7
    %v940 = vsub.s32 %v937, %v939
    %v941 = vrot.slane %v933, %v940
    %v943 = vunpack.c.l.s4 1966171168
    %v944 = vunpack.c.0.s8 %v943
    %v945 = vlaneseq
    %v946 = vshrl.u32 %v945, 7
    %v947 = vsub.s32 %v944, %v946
    %v948 = vrot.slane %v934, %v947
    %v949 = vlaneseq
    %v950 = vshrl.u32 %v949, 7
    %v951 = vsub.s32 0, %v950
    %v952 = vrot.slane %v941, %v951
    %v953 = vlaneseq
    %v954 = vshrl.u32 %v953, 7
    %v955 = vsub.s32 0, %v954
    %v956 = vrot.slane %v948, %v955
    %v959 = vmul.f32 %v952, %v512
    %v960 = vmul.f32 %v956, %v512
    %v963 = vunpack.c.l.s4 1966171168
    %v964 = vunpack.c.0.s8 %v963
    %v965 = vlaneseq
    %v966 = vshrl.u32 %v965, 7
    %v967 = vsub.s32 %v964, %v966
    %v968 = vrot.slane %v925, %v967
    %v969 = vcombine.high %v968, %v968
    %v971 = vunpack.c.l.s4 1966171168
    %v972 = vunpack.c.0.s8 %v971
    %v973 = vlaneseq
    %v974 = vshrl.u32 %v973, 7
    %v975 = vsub.s32 %v972, %v974
    %v976 = vrot.slane %v968, %v975
    %v978 = vunpack.c.l.s4 1966171168
    %v979 = vunpack.c.0.s8 %v978
    %v980 = vlaneseq
    %v981 = vshrl.u32 %v980, 7
    %v982 = vsub.s32 %v979, %v981
    %v983 = vrot.slane %v969, %v982
    %v984 = vlaneseq
    %v985 = vshrl.u32 %v984, 7
    %v986 = vsub.s32 0, %v985
    %v987 = vrot.slane %v976, %v986
    %v988 = vlaneseq
    %v989 = vshrl.u32 %v988, 7
    %v990 = vsub.s32 0, %v989
    %v991 = vrot.slane %v983, %v990
    %v994 = vsub.f32 %v959, %v987
    %v995 = vsub.f32 %v960, %v991
    %v996 = vmul.f32 %v994, 1.442695
    %v997 = vpow.pop %v996
    %v998 = vmul.f32 %v995, 1.442695
    %v999 = vpow.pop %v998
    %v1000 = vmul.f32 %v997, %v528
    %v1001 = vmul.f32 %v999, %v528
    %v1002 = vsel %vm529, %v1000, 0.0
    %v1003 = vrot.slane %v1002, 4
    %v1004 = vadd.f32 %v1002, %v1003
    %v1005 = vrot.slane %v1004, 2
    %v1006 = vadd.f32 %v1004, %v1005
    %v1007 = vrot.slane %v1006, 1
    %v1008 = vadd.f32 %v1006, %v1007
    %v1009 = vsel %vm529, %v1001, 0.0
    %v1010 = vrot.slane %v1009, 4
    %v1011 = vadd.f32 %v1009, %v1010
    %v1012 = vrot.slane %v1011, 2
    %v1013 = vadd.f32 %v1011, %v1012
    %v1014 = vrot.slane %v1013, 1
    %v1015 = vadd.f32 %v1013, %v1014
    %v1016 = vsel %vm529, %v997, 0.0
    %v1017 = vrot.slane %v1016, 4
    %v1018 = vadd.f32 %v1016, %v1017
    %v1019 = vrot.slane %v1018, 2
    %v1020 = vadd.f32 %v1018, %v1019
    %v1021 = vrot.slane %v1020, 1
    %v1022 = vadd.f32 %v1020, %v1021
    %v1023 = vsel %vm529, %v999, 0.0
    %v1024 = vrot.slane %v1023, 4
    %v1025 = vadd.f32 %v1023, %v1024
    %v1026 = vrot.slane %v1025, 2
    %v1027 = vadd.f32 %v1025, %v1026
    %v1028 = vrot.slane %v1027, 1
    %v1029 = vadd.f32 %v1027, %v1028
    %v1030 = vrcp.pop %v1022
    %v1031 = vrcp.pop %v1029
    %v1032 = vmul.f32 %v1008, %v1030
    %v1033 = vmul.f32 %v1015, %v1031
    %s1034 = sld [smem:[#allocation9 + $0x54]]
    %v1035 = vstv %s1034
    %v1036 = vmul.f32 %v654, %v1035
    %v1037 = vmul.f32 %v655, %v1035
    %s1038 = sld [smem:[#allocation9 + $0x55]]
    %v1039 = vstv %s1038
    %v1040 = vmul.f32 %v780, %v1039
    %v1041 = vmul.f32 %v781, %v1039
    %v1042 = vadd.f32 %v1036, %v1040
    %v1043 = vadd.f32 %v1037, %v1041
    %s1044 = sld [smem:[#allocation9 + $0x56]]
    %v1045 = vstv %s1044
    %v1046 = vmul.f32 %v906, %v1045
    %v1047 = vmul.f32 %v907, %v1045
    %v1048 = vadd.f32 %v1042, %v1046
    %v1049 = vadd.f32 %v1043, %v1047
    %s1050 = sld [smem:[#allocation9 + $0x57]]
    %v1051 = vstv %s1050
    %v1052 = vmul.f32 %v1032, %v1051
    %v1053 = vmul.f32 %v1033, %v1051
    %v1054 = vadd.f32 %v1048, %v1052
    %v1055 = vadd.f32 %v1049, %v1053
    %s1056 = sld [smem:[#allocation9 + $0x64]]
    %v1057 = vstv %s1056
    %v1058 = vadd.f32 %v1054, %v1057
    %v1059 = vadd.f32 %v1055, %v1057
    %s1060 = sld [smem:[#allocation9 + $0x58]]
    %v1061 = vstv %s1060
    %v1062 = vmul.f32 %v654, %v1061
    %v1063 = vmul.f32 %v655, %v1061
    %s1064 = sld [smem:[#allocation9 + $0x59]]
    %v1065 = vstv %s1064
    %v1066 = vmul.f32 %v780, %v1065
    %v1067 = vmul.f32 %v781, %v1065
    %v1068 = vadd.f32 %v1062, %v1066
    %v1069 = vadd.f32 %v1063, %v1067
    %s1070 = sld [smem:[#allocation9 + $0x5a]]
    %v1071 = vstv %s1070
    %v1072 = vmul.f32 %v906, %v1071
    %v1073 = vmul.f32 %v907, %v1071
    %v1074 = vadd.f32 %v1068, %v1072
    %v1075 = vadd.f32 %v1069, %v1073
    %s1076 = sld [smem:[#allocation9 + $0x5b]]
    %v1077 = vstv %s1076
    %v1078 = vmul.f32 %v1032, %v1077
    %v1079 = vmul.f32 %v1033, %v1077
    %v1080 = vadd.f32 %v1074, %v1078
    %v1081 = vadd.f32 %v1075, %v1079
    %s1082 = sld [smem:[#allocation9 + $0x65]]
    %v1083 = vstv %s1082
    %v1084 = vadd.f32 %v1080, %v1083
    %v1085 = vadd.f32 %v1081, %v1083
    %s1086 = sld [smem:[#allocation9 + $0x5c]]
    %v1087 = vstv %s1086
    %v1088 = vmul.f32 %v654, %v1087
    %v1089 = vmul.f32 %v655, %v1087
    %s1090 = sld [smem:[#allocation9 + $0x5d]]
    %v1091 = vstv %s1090
    %v1092 = vmul.f32 %v780, %v1091
    %v1093 = vmul.f32 %v781, %v1091
    %v1094 = vadd.f32 %v1088, %v1092
    %v1095 = vadd.f32 %v1089, %v1093
    %s1096 = sld [smem:[#allocation9 + $0x5e]]
    %v1097 = vstv %s1096
    %v1098 = vmul.f32 %v906, %v1097
    %v1099 = vmul.f32 %v907, %v1097
    %v1100 = vadd.f32 %v1094, %v1098
    %v1101 = vadd.f32 %v1095, %v1099
    %s1102 = sld [smem:[#allocation9 + $0x5f]]
    %v1103 = vstv %s1102
    %v1104 = vmul.f32 %v1032, %v1103
    %v1105 = vmul.f32 %v1033, %v1103
    %v1106 = vadd.f32 %v1100, %v1104
    %v1107 = vadd.f32 %v1101, %v1105
    %s1108 = sld [smem:[#allocation9 + $0x66]]
    %v1109 = vstv %s1108
    %v1110 = vadd.f32 %v1106, %v1109
    %v1111 = vadd.f32 %v1107, %v1109
    %s1112 = sld [smem:[#allocation9 + $0x60]]
    %v1113 = vstv %s1112
    %v1114 = vmul.f32 %v654, %v1113
    %v1115 = vmul.f32 %v655, %v1113
    %s1116 = sld [smem:[#allocation9 + $0x61]]
    %v1117 = vstv %s1116
    %v1118 = vmul.f32 %v780, %v1117
    %v1119 = vmul.f32 %v781, %v1117
    %v1120 = vadd.f32 %v1114, %v1118
    %v1121 = vadd.f32 %v1115, %v1119
    %s1122 = sld [smem:[#allocation9 + $0x62]]
    %v1123 = vstv %s1122
    %v1124 = vmul.f32 %v906, %v1123
    %v1125 = vmul.f32 %v907, %v1123
    %v1126 = vadd.f32 %v1120, %v1124
    %v1127 = vadd.f32 %v1121, %v1125
    %s1128 = sld [smem:[#allocation9 + $0x63]]
    %v1129 = vstv %s1128
    %v1130 = vmul.f32 %v1032, %v1129
    %v1131 = vmul.f32 %v1033, %v1129
    %v1132 = vadd.f32 %v1126, %v1130
    %v1133 = vadd.f32 %v1127, %v1131
    %s1134 = sld [smem:[#allocation9 + $0x67]]
    %v1135 = vstv %s1134
    %v1136 = vadd.f32 %v1132, %v1135
    %v1137 = vadd.f32 %v1133, %v1135
    %v1138 = vadd.f32 %v1058, %v1084
    %v1139 = vadd.f32 %v1059, %v1085
    %v1140 = vadd.f32 %v1138, %v1110
    %v1141 = vadd.f32 %v1139, %v1111
    %v1142 = vadd.f32 %v1140, %v1136
    %v1143 = vadd.f32 %v1141, %v1137
    %v1144 = vmul.f32 %v1142, 0.25
    %v1145 = vmul.f32 %v1143, 0.25
    %v1146 = vsub.f32 %v1058, %v1144
    %v1147 = vsub.f32 %v1059, %v1145
    %v1148 = vsub.f32 %v1084, %v1144
    %v1149 = vsub.f32 %v1085, %v1145
    %v1150 = vsub.f32 %v1110, %v1144
    %v1151 = vsub.f32 %v1111, %v1145
    %v1152 = vsub.f32 %v1136, %v1144
    %v1153 = vsub.f32 %v1137, %v1145
    %v1154 = vmul.f32 %v1146, %v1146
    %v1155 = vmul.f32 %v1147, %v1147
    %v1156 = vmul.f32 %v1148, %v1148
    %v1157 = vmul.f32 %v1149, %v1149
    %v1158 = vadd.f32 %v1154, %v1156
    %v1159 = vadd.f32 %v1155, %v1157
    %v1160 = vmul.f32 %v1150, %v1150
    %v1161 = vmul.f32 %v1151, %v1151
    %v1162 = vadd.f32 %v1158, %v1160
    %v1163 = vadd.f32 %v1159, %v1161
    %v1164 = vmul.f32 %v1152, %v1152
    %v1165 = vmul.f32 %v1153, %v1153
    %v1166 = vadd.f32 %v1162, %v1164
    %v1167 = vadd.f32 %v1163, %v1165
    %v1168 = vmul.f32 %v1166, 0.25
    %v1169 = vmul.f32 %v1167, 0.25
    %v1170 = vadd.f32 %v1168, 1e-05
    %v1171 = vadd.f32 %v1169, 1e-05
    %v1172 = vrsqrt.pop %v1170
    %v1173 = vrsqrt.pop %v1171
    %v1174 = vmul.f32 %v1146, %v1172
    %v1175 = vmul.f32 %v1147, %v1173
    %s1176 = sld [smem:[#allocation9 + $0x68]]
    %v1177 = vstv %s1176
    %v1178 = vmul.f32 %v1174, %v1177
    %v1179 = vmul.f32 %v1175, %v1177
    %s1180 = sld [smem:[#allocation9 + $0x6c]]
    %v1181 = vstv %s1180
    %v1182 = vadd.f32 %v1178, %v1181
    %v1183 = vadd.f32 %v1179, %v1181
    %s1184 = sld [smem:[#allocation9 + $0x70]]
    %v1185 = vstv %s1184
    %v1186 = vmul.f32 %v1182, %v1185
    %v1187 = vmul.f32 %v1183, %v1185
    %v1188 = vmul.f32 %v1148, %v1172
    %v1189 = vmul.f32 %v1149, %v1173
    %s1190 = sld [smem:[#allocation9 + $0x69]]
    %v1191 = vstv %s1190
    %v1192 = vmul.f32 %v1188, %v1191
    %v1193 = vmul.f32 %v1189, %v1191
    %s1194 = sld [smem:[#allocation9 + $0x6d]]
    %v1195 = vstv %s1194
    %v1196 = vadd.f32 %v1192, %v1195
    %v1197 = vadd.f32 %v1193, %v1195
    %s1198 = sld [smem:[#allocation9 + $0x71]]
    %v1199 = vstv %s1198
    %v1200 = vmul.f32 %v1196, %v1199
    %v1201 = vmul.f32 %v1197, %v1199
    %v1202 = vadd.f32 %v1186, %v1200
    %v1203 = vadd.f32 %v1187, %v1201
    %v1204 = vmul.f32 %v1150, %v1172
    %v1205 = vmul.f32 %v1151, %v1173
    %s1206 = sld [smem:[#allocation9 + $0x6a]]
    %v1207 = vstv %s1206
    %v1208 = vmul.f32 %v1204, %v1207
    %v1209 = vmul.f32 %v1205, %v1207
    %s1210 = sld [smem:[#allocation9 + $0x6e]]
    %v1211 = vstv %s1210
    %v1212 = vadd.f32 %v1208, %v1211
    %v1213 = vadd.f32 %v1209, %v1211
    %s1214 = sld [smem:[#allocation9 + $0x72]]
    %v1215 = vstv %s1214
    %v1216 = vmul.f32 %v1212, %v1215
    %v1217 = vmul.f32 %v1213, %v1215
    %v1218 = vadd.f32 %v1202, %v1216
    %v1219 = vadd.f32 %v1203, %v1217
    %v1220 = vmul.f32 %v1152, %v1172
    %v1221 = vmul.f32 %v1153, %v1173
    %s1222 = sld [smem:[#allocation9 + $0x6b]]
    %v1223 = vstv %s1222
    %v1224 = vmul.f32 %v1220, %v1223
    %v1225 = vmul.f32 %v1221, %v1223
    %s1226 = sld [smem:[#allocation9 + $0x6f]]
    %v1227 = vstv %s1226
    %v1228 = vadd.f32 %v1224, %v1227
    %v1229 = vadd.f32 %v1225, %v1227
    %s1230 = sld [smem:[#allocation9 + $0x73]]
    %v1231 = vstv %s1230
    %v1232 = vmul.f32 %v1228, %v1231
    %v1233 = vmul.f32 %v1229, %v1231
    %v1234 = vadd.f32 %v1218, %v1232
    %v1235 = vadd.f32 %v1219, %v1233
    %s1236 = sld [smem:[#allocation9 + $0x74]]
    %v1237 = vstv %s1236
    %v1238 = vadd.f32 %v1234, %v1237
    %v1239 = vadd.f32 %v1235, %v1237
    %vm1242 = vcmask 1041409
    %v1243 = vsel %vm1242, %v1239, %v1238
    %v1245 = vadd.f32 %v139, %v1243
    %v1246 = vmax.f32 %v1245, 0.0
    %1247 = vst.msk [vmem:[#allocation10] sm:$0x3] %vm529, %v1246
    // Predicated region
    $region34: #{tpu_custom_call.1} parent=1 // pred_check
      _
    $region35: #{tpu_custom_call.1} parent=1 // pred_check_branch
      %1249 = sbr.rel (0) target = $region37
    $region36: #{tpu_custom_call.1} parent=1 // pred_region
      %s1251 = ssub.s32 32, 32
      %1252 = vsyncadd [#allocation4], %s1251
      %s1254 = sshll.u32 [#allocation10], 4
      %s1255 = int_to_ptr.vmem [resolvable:$true] %s1254
      %1257 = dma.vmem_to_hbm [thread:$0]  %s1255, 32, %s4, [#allocation4]
    $region37: #{tpu_custom_call.1} parent=1 // pred_fallthru
      _
    // Predicated region
    $region38: #{tpu_custom_call.1} parent=1 // pred_check
      _
    $region39: #{tpu_custom_call.1} parent=1 // pred_check_branch
      %1259 = sbr.rel (0) target = $region41
    $region40: #{tpu_custom_call.1} parent=1 // pred_region
      %1260 = dma.done [#allocation4], 32
    $region41: #{tpu_custom_call.1} parent=1 // pred_fallthru
      _
    %1261 = vsyncpa [#allocation3], 1
    %1262 = vsyncpa [#allocation7], 1
    %1263 = vsyncpa [#allocation4], 1
    %1264 = vsyncpa [#allocation5], 1

</llo_original>
